<compile_context>
chip_gen: v7x
topology: tpu7x:2x2x1
jax: 0.10.0
libtpu: 0.0.40
codegen_flags: <defaults>
</compile_context>

<pallas_src>
import functools

import jax
import jax.numpy as jnp
from jax import lax
from jax.experimental import pallas as pl
from jax.experimental.pallas import tpu as pltpu


# ------------------------------------------------------------------ in-kernel helpers

def _ln(x, g, b, eps):
    mu = jnp.mean(x, axis=-1, keepdims=True)
    var = jnp.mean(jnp.square(x - mu), axis=-1, keepdims=True)
    return (x - mu) * lax.rsqrt(var + eps) * g + b


# ------------------------------------------------------------------ fused TST kernel

def _tst_kernel(x_ref, pe_ref, mask_ref, w_in_ref, b_in_ref,
                w_qkv_ref, w_o_ref, w_f1_ref, w_f2_ref, vec_ref,
                w_out_ref, b_out_ref,
                out_ref,
                z_ref, ctx_ref,
                *, Bb, S, H, Dh, P, E, F, eps):
    l = pl.program_id(1)
    T = Bb * S

    # ---- layer 0: input projection + sinusoidal positional encoding (fused) ----
    @pl.when(l == 0)
    def _():
        xb = x_ref[...].reshape(T, -1).astype(jnp.bfloat16)
        z0 = jnp.dot(xb, w_in_ref[...], preferred_element_type=jnp.float32)
        z_ref[...] = z0 + b_in_ref[...] + pe_ref[...].reshape(T, E)

    z = z_ref[...]                                   # (T, E) f32, resident across layers

    # ---- coalesced per-layer vectors: single (8, W) f32 blob, one DMA per layer ----
    vec = vec_ref[...]
    b_qkv = vec[0:1, :3 * E]
    b_o   = vec[1:2, :E]
    b_f1  = vec[2:3, :F]
    b_f2  = vec[3:4, :E]
    ln1_g = vec[4:5, :E]
    ln1_b = vec[5:6, :E]
    ln2_g = vec[6:7, :E]
    ln2_b = vec[7:8, :E]

    # ---- fused QKV projection (scale folded into Wq): bf16 MXU, f32 accumulate ----
    zb = z.astype(jnp.bfloat16)
    qkv = jnp.dot(zb, w_qkv_ref[...], preferred_element_type=jnp.float32) + b_qkv
    qb = qkv[:, 0 * E:1 * E].astype(jnp.bfloat16)
    kb = qkv[:, 1 * E:2 * E].astype(jnp.bfloat16)
    vb = qkv[:, 2 * E:3 * E].astype(jnp.bfloat16)

    # ---- causal multi-head self-attention; heads -> static lane slices of a VMEM slab ----
    mask = mask_ref[...]                             # (S, S) additive mask, f32
    for b in range(Bb):                              # small static unroll (Bb capped in wrapper)
        r = slice(b * S, (b + 1) * S)
        for h in range(H):
            c = slice(h * Dh, (h + 1) * Dh)
            s = jnp.einsum("qd,kd->qk", qb[r, c], kb[r, c],
                           preferred_element_type=jnp.float32) + mask
            m = jnp.max(s, axis=-1, keepdims=True)
            p = jnp.exp(s - m)                       # f32 softmax statistics
            inv = pl.reciprocal(jnp.sum(p, axis=-1, keepdims=True), approx=True)
            ctx_h = jnp.dot(p.astype(jnp.bfloat16), vb[r, c],
                            preferred_element_type=jnp.float32) * inv
            ctx_ref[r, c] = ctx_h.astype(jnp.bfloat16)

    ctx = ctx_ref[...]                               # (T, E) bf16

    # ---- output projection + residual + LN1 (fused, f32 residual path) ----
    attn = jnp.dot(ctx, w_o_ref[...], preferred_element_type=jnp.float32) + b_o
    z = _ln(z + attn, ln1_g, ln1_b, eps)

    # ---- feed-forward (relu) + residual + LN2 (fused) ----
    f = jnp.dot(z.astype(jnp.bfloat16), w_f1_ref[...],
                preferred_element_type=jnp.float32) + b_f1
    f = jnp.maximum(f, 0.0)
    f = jnp.dot(f.astype(jnp.bfloat16), w_f2_ref[...],
                preferred_element_type=jnp.float32) + b_f2
    z = _ln(z + f, ln2_g, ln2_b, eps)
    z_ref[...] = z

    # ---- last layer: project ONLY the last pred_len rows of each sequence ----
    @pl.when(l == pl.num_programs(1) - 1)
    def _():
        w_out = w_out_ref[...]
        b_out = b_out_ref[...]
        for b in range(Bb):
            zl = z[b * S + S - P: b * S + S, :].astype(jnp.bfloat16)   # (P, E)
            out_ref[b] = jnp.dot(zl, w_out, preferred_element_type=jnp.float32) + b_out


# ------------------------------------------------------------------ wrapper

def sinusoidal_pe(timestamps, embed_dim):
    """timestamps: (B, S) float -> (B, S, E) sinusoidal encoding (sin/cos interleaved)."""
    half = embed_dim // 2
    i = jnp.arange(half, dtype=jnp.float32)
    div = jnp.exp(-jnp.log(10000.0) * (2.0 * i) / embed_dim)
    ang = timestamps[..., None] * div                           # (B, S, half)
    pe = jnp.stack([jnp.sin(ang), jnp.cos(ang)], axis=-1)       # (B, S, half, 2)
    return pe.reshape(timestamps.shape[0], timestamps.shape[1], embed_dim)


def init_params(key, cfg):
    """Parameters in the fused / stacked / bf16 layout the kernel consumes.

    One-time constant folds (not per step):
      * wq|wk|wv concatenated into a single (E, 3E) bf16 weight per layer,
      * attention scale 1/sqrt(head_dim) folded into the Q weight/bias,
      * all small per-layer vectors packed into one (L, 8, W) f32 blob.
    """
    E, F, H = cfg["embed_dim"], cfg["ffn_dim"], cfg["num_heads"]
    in_dim, out_dim, L = cfg["in_dim"], cfg["out_dim"], cfg["num_layers"]
    Dh = E // H
    scale = 1.0 / (Dh ** 0.5)
    W = max(3 * E, F, E)

    def dense(k, fi, fo):
        w = jax.random.normal(k, (fi, fo), jnp.float32) * (1.0 / jnp.sqrt(fi))
        return w, jnp.zeros((fo,), jnp.float32)

    keys = jax.random.split(key, 2 + L)
    w_in, b_in = dense(keys[0], in_dim, E)
    w_out, b_out = dense(keys[1], E, out_dim)

    w_qkv, w_o, w_f1, w_f2, vecs = [], [], [], [], []
    for l in range(L):
        ks = jax.random.split(keys[2 + l], 6)
        wq, bq = dense(ks[0], E, E)
        wk, bk = dense(ks[1], E, E)
        wv, bv = dense(ks[2], E, E)
        w_qkv.append(jnp.concatenate([wq * scale, wk, wv], axis=1))     # (E, 3E)
        wo_, bo_ = dense(ks[3], E, E)
        wf1, bf1_ = dense(ks[4], E, F)
        wf2, bf2_ = dense(ks[5], F, E)
        w_o.append(wo_); w_f1.append(wf1); w_f2.append(wf2)

        v = jnp.zeros((8, W), jnp.float32)
        v = v.at[0, :3 * E].set(jnp.concatenate([bq * scale, bk, bv]))  # b_qkv
        v = v.at[1, :E].set(bo_)                                        # b_o
        v = v.at[2, :F].set(bf1_)                                       # b_f1
        v = v.at[3, :E].set(bf2_)                                       # b_f2
        v = v.at[4, :E].set(jnp.ones((E,), jnp.float32))                # ln1 gamma
        v = v.at[6, :E].set(jnp.ones((E,), jnp.float32))                # ln2 gamma
        # rows 5, 7 (ln betas) stay zero
        vecs.append(v)

    bf = lambda xs: jnp.stack(xs, axis=0).astype(jnp.bfloat16)
    return {
        "w_in": w_in.astype(jnp.bfloat16), "b_in": b_in[None],
        "w_out": w_out.astype(jnp.bfloat16), "b_out": b_out[None],
        "w_qkv": bf(w_qkv), "w_o": bf(w_o), "w_f1": bf(w_f1), "w_f2": bf(w_f2),
        "vec": jnp.stack(vecs, axis=0),
    }


def _pick_block_b(B, S):
    """Largest divisor of B with Bb capped (trace size) and Bb*S rows kept VMEM-friendly.
    On v7x, prefer an even number of batch blocks (B // Bb) to keep both TCs busy."""
    bb = max(1, min(B, 16, 1024 // max(S, 1)))
    while B % bb:
        bb -= 1
    return bb


def tst_forward(params, x, timestamps, *, cfg, block_b=None):
    """Non-autoregressive TST.forward(x, timestamps, ar=False) in one pallas_call."""
    B, S, in_dim = x.shape
    E = cfg["embed_dim"]; H = cfg["num_heads"]; Dh = E // H
    F = cfg["ffn_dim"]; P = cfg["pred_len"]; L = cfg["num_layers"]
    out_dim = cfg["out_dim"]
    W = params["vec"].shape[-1]

    Bb = block_b if block_b is not None else _pick_block_b(B, S)
    assert B % Bb == 0, (B, Bb)
    nB = B // Bb
    T = Bb * S

    pe = sinusoidal_pe(timestamps, E)                            # (B, S, E) f32
    # Additive causal mask built once on the host (constant index_map -> fetched once).
    qi = jnp.arange(S)[:, None]
    ki = jnp.arange(S)[None, :]
    mask = jnp.where(ki <= qi, 0.0, -1e30).astype(jnp.float32)

    kern = functools.partial(_tst_kernel, Bb=Bb, S=S, H=H, Dh=Dh, P=P, E=E, F=F, eps=1e-5)

    def fixed(shape):                     # same block for every grid step
        n = len(shape)
        return pl.BlockSpec(shape, lambda bi, l: (0,) * n)

    def per_layer(tail):                  # stacked-by-layer params, leading dim squeezed
        return pl.BlockSpec((None,) + tail, lambda bi, l: (l,) + (0,) * len(tail))

    def per_batch(tail):                  # Bb batch elements per grid step
        return pl.BlockSpec((Bb,) + tail, lambda bi, l: (bi,) + (0,) * len(tail))

    # VMEM budget arithmetic (bytes): 2x double-buffered streamed blocks + resident scratch.
    per_layer_bytes = 2 * (E * 3 * E + E * E + 2 * E * F) + 4 * 8 * W
    act_bytes = 4 * (T * in_dim + T * E) + 4 * Bb * P * out_dim
    fixed_bytes = 2 * (in_dim * E + E * out_dim) + 4 * (E + out_dim + S * S)
    scratch_bytes = 4 * T * E + 2 * T * E
    need = 2 * (per_layer_bytes + act_bytes) + fixed_bytes + scratch_bytes
    # v7x only has 64 MiB physical VMEM -> never request more than that.
    vmem_limit = int(min(max(2 * need, 32 << 20), 64 << 20))

    grid_spec = pltpu.PrefetchScalarGridSpec(
        num_scalar_prefetch=0,
        grid=(nB, L),
        in_specs=[
            per_batch((S, in_dim)),       # x
            per_batch((S, E)),            # pe
            fixed((S, S)),                # additive causal mask
            fixed((in_dim, E)),           # w_in  (bf16)
            fixed((1, E)),                # b_in  (f32)
            per_layer((E, 3 * E)),        # w_qkv (bf16, scale folded into Q part)
            per_layer((E, E)),            # w_o   (bf16)
            per_layer((E, F)),            # w_f1  (bf16)
            per_layer((F, E)),            # w_f2  (bf16)
            per_layer((8, W)),            # coalesced per-layer vectors (f32)
            fixed((E, out_dim)),          # w_out (bf16)
            fixed((1, out_dim)),          # b_out (f32)
        ],
        out_specs=per_batch((P, out_dim)),
        scratch_shapes=[
            pltpu.VMEM((T, E), jnp.float32),    # z: hidden state, resident across layers
            pltpu.VMEM((T, E), jnp.bfloat16),   # ctx slab: per-head contexts at lane offsets
        ],
    )

    return pl.pallas_call(
        kern,
        grid_spec=grid_spec,
        out_shape=jax.ShapeDtypeStruct((B, P, out_dim), jnp.float32),
        compiler_params=pltpu.CompilerParams(
            dimension_semantics=("parallel", "arbitrary"),   # batch blocks parallel (2 TCs v7x)
            vmem_limit_bytes=vmem_limit),
    )(x, pe, mask,
      params["w_in"], params["b_in"],
      params["w_qkv"], params["w_o"], params["w_f1"], params["w_f2"],
      params["vec"],
      params["w_out"], params["b_out"])


# ------------------------------------------------------------------ main

if __name__ == "__main__":
    cfg = dict(in_dim=4, out_dim=4, embed_dim=32, ffn_dim=64,
               num_heads=4, num_layers=2, seq_len=8, pred_len=4)
    B = 2

    key = jax.random.PRNGKey(0)
    kp, kx = jax.random.split(key)
    params = init_params(kp, cfg)

    x = jax.random.normal(kx, (B, cfg["seq_len"], cfg["in_dim"]), jnp.float32)
    timestamps = jnp.broadcast_to(
        jnp.arange(cfg["seq_len"], dtype=jnp.float32)[None, :], (B, cfg["seq_len"])
    )

    fwd = jax.jit(functools.partial(tst_forward, cfg=cfg))
    out = fwd(params, x, timestamps)
    jax.block_until_ready(out)

    assert out.shape == (B, cfg["pred_len"], cfg["out_dim"]), out.shape
    assert bool(jnp.all(jnp.isfinite(out)))
    print("KERNEL_OK")
</pallas_src>

<mosaic_0001>
module attributes {stable_mosaic.version = 11 : i64} {
  func.func @_tst_kernel(%arg0: i32, %arg1: i32, %arg2: memref<2x8x4xf32, #tpu.memory_space<vmem>>, %arg3: memref<2x8x32xf32, #tpu.memory_space<vmem>>, %arg4: memref<8x8xf32, #tpu.memory_space<vmem>>, %arg5: memref<4x32xbf16, #tpu.memory_space<vmem>>, %arg6: memref<1x32xf32, #tpu.memory_space<vmem>>, %arg7: memref<1x32x96xbf16, #tpu.memory_space<vmem>>, %arg8: memref<1x32x32xbf16, #tpu.memory_space<vmem>>, %arg9: memref<1x32x64xbf16, #tpu.memory_space<vmem>>, %arg10: memref<1x64x32xbf16, #tpu.memory_space<vmem>>, %arg11: memref<1x8x96xf32, #tpu.memory_space<vmem>>, %arg12: memref<32x4xbf16, #tpu.memory_space<vmem>>, %arg13: memref<1x4xf32, #tpu.memory_space<vmem>>, %arg14: memref<2x4x4xf32, #tpu.memory_space<vmem>>, %arg15: memref<16x32xf32, #tpu.memory_space<vmem>>, %arg16: memref<16x32xbf16, #tpu.memory_space<vmem>>) attributes {dimension_semantics = [#tpu.dimension_semantics<parallel>, #tpu.dimension_semantics<arbitrary>], iteration_bounds = array<i64: 1, 2>, scalar_prefetch = 0 : i64, scratch_operands = 2 : i64, tpu.core_type = #tpu.core_type<tc>, window_params = [{transform_indices = @transform_0, window_bounds = array<i64: 2, 8, 4>}, {transform_indices = @transform_1, window_bounds = array<i64: 2, 8, 32>}, {pipeline_mode = #tpu.pipeline_mode<synchronous>, transform_indices = @transform_2, window_bounds = array<i64: 8, 8>}, {pipeline_mode = #tpu.pipeline_mode<synchronous>, transform_indices = @transform_3, window_bounds = array<i64: 4, 32>}, {pipeline_mode = #tpu.pipeline_mode<synchronous>, transform_indices = @transform_4, window_bounds = array<i64: 1, 32>}, {transform_indices = @transform_5, window_bounds = array<i64: 1, 32, 96>}, {transform_indices = @transform_6, window_bounds = array<i64: 1, 32, 32>}, {transform_indices = @transform_7, window_bounds = array<i64: 1, 32, 64>}, {transform_indices = @transform_8, window_bounds = array<i64: 1, 64, 32>}, {transform_indices = @transform_9, window_bounds = array<i64: 1, 8, 96>}, {pipeline_mode = #tpu.pipeline_mode<synchronous>, transform_indices = @transform_10, window_bounds = array<i64: 32, 4>}, {pipeline_mode = #tpu.pipeline_mode<synchronous>, transform_indices = @transform_11, window_bounds = array<i64: 1, 4>}, {transform_indices = @transform_12, window_bounds = array<i64: 2, 4, 4>}]} {
    %c0_i32 = arith.constant 0 : i32
    %0 = arith.cmpi eq, %arg1, %c0_i32 : i32
    %1 = arith.extui %0 : i1 to i32
    %c0_i32_0 = arith.constant 0 : i32
    %2 = arith.cmpi ne, %1, %c0_i32_0 : i32
    scf.if %2 {
      %c0_83 = arith.constant 0 : index
      %c0_84 = arith.constant 0 : index
      %c0_85 = arith.constant 0 : index
      %249 = vector.load %arg2[%c0_83, %c0_84, %c0_85] : memref<2x8x4xf32, #tpu.memory_space<vmem>>, vector<2x8x4xf32>
      %250 = vector.shape_cast %249 : vector<2x8x4xf32> to vector<16x4xf32>
      %251 = arith.truncf %250 : vector<16x4xf32> to vector<16x4xbf16>
      %c0_86 = arith.constant 0 : index
      %c0_87 = arith.constant 0 : index
      %252 = vector.load %arg5[%c0_86, %c0_87] : memref<4x32xbf16, #tpu.memory_space<vmem>>, vector<4x32xbf16>
      %cst_88 = arith.constant dense<0.000000e+00> : vector<16x32xf32>
      %253 = tpu.matmul %251, %252, %cst_88 {dimension_numbers = #tpu.dot_dimension_numbers<[1], [0], [0], [1], [0, 0, 1, 1], [], []>} : vector<16x4xbf16>, vector<4x32xbf16>, vector<16x32xf32> -> vector<16x32xf32>
      %c0_89 = arith.constant 0 : index
      %c0_90 = arith.constant 0 : index
      %254 = vector.load %arg6[%c0_89, %c0_90] : memref<1x32xf32, #tpu.memory_space<vmem>>, vector<1x32xf32>
      %255 = vector.broadcast %254 : vector<1x32xf32> to vector<16x32xf32>
      %256 = arith.addf %253, %255 : vector<16x32xf32>
      %c0_91 = arith.constant 0 : index
      %c0_92 = arith.constant 0 : index
      %c0_93 = arith.constant 0 : index
      %257 = vector.load %arg3[%c0_91, %c0_92, %c0_93] : memref<2x8x32xf32, #tpu.memory_space<vmem>>, vector<2x8x32xf32>
      %258 = vector.shape_cast %257 : vector<2x8x32xf32> to vector<16x32xf32>
      %259 = arith.addf %256, %258 : vector<16x32xf32>
      %c0_94 = arith.constant 0 : index
      %c0_95 = arith.constant 0 : index
      %260 = vector.load %arg15[%c0_94, %c0_95] : memref<16x32xf32, #tpu.memory_space<vmem>>, vector<16x32xf32>
      tpu.vector_store %arg15[%c0_94, %c0_95], %259 {strides = array<i32>} : memref<16x32xf32, #tpu.memory_space<vmem>>, vector<16x32xf32>,
    } else {
    }
    %c0 = arith.constant 0 : index
    %c0_1 = arith.constant 0 : index
    %3 = vector.load %arg15[%c0, %c0_1] : memref<16x32xf32, #tpu.memory_space<vmem>>, vector<16x32xf32>
    %c0_2 = arith.constant 0 : index
    %c0_3 = arith.constant 0 : index
    %c0_4 = arith.constant 0 : index
    %4 = vector.load %arg11[%c0_2, %c0_3, %c0_4] : memref<1x8x96xf32, #tpu.memory_space<vmem>>, vector<1x8x96xf32>
    %5 = vector.shape_cast %4 : vector<1x8x96xf32> to vector<8x96xf32>
    %6 = vector.extract_strided_slice %5 {offsets = [0, 0], sizes = [1, 96], strides = [1, 1]} : vector<8x96xf32> to vector<1x96xf32>
    %7 = vector.extract_strided_slice %5 {offsets = [1, 0], sizes = [1, 32], strides = [1, 1]} : vector<8x96xf32> to vector<1x32xf32>
    %8 = vector.extract_strided_slice %5 {offsets = [2, 0], sizes = [1, 64], strides = [1, 1]} : vector<8x96xf32> to vector<1x64xf32>
    %9 = vector.extract_strided_slice %5 {offsets = [3, 0], sizes = [1, 32], strides = [1, 1]} : vector<8x96xf32> to vector<1x32xf32>
    %10 = vector.extract_strided_slice %5 {offsets = [4, 0], sizes = [1, 32], strides = [1, 1]} : vector<8x96xf32> to vector<1x32xf32>
    %11 = vector.extract_strided_slice %5 {offsets = [5, 0], sizes = [1, 32], strides = [1, 1]} : vector<8x96xf32> to vector<1x32xf32>
    %12 = vector.extract_strided_slice %5 {offsets = [6, 0], sizes = [1, 32], strides = [1, 1]} : vector<8x96xf32> to vector<1x32xf32>
    %13 = vector.extract_strided_slice %5 {offsets = [7, 0], sizes = [1, 32], strides = [1, 1]} : vector<8x96xf32> to vector<1x32xf32>
    %14 = arith.truncf %3 : vector<16x32xf32> to vector<16x32xbf16>
    %c0_5 = arith.constant 0 : index
    %c0_6 = arith.constant 0 : index
    %c0_7 = arith.constant 0 : index
    %15 = vector.load %arg7[%c0_5, %c0_6, %c0_7] : memref<1x32x96xbf16, #tpu.memory_space<vmem>>, vector<1x32x96xbf16>
    %16 = vector.shape_cast %15 : vector<1x32x96xbf16> to vector<32x96xbf16>
    %cst = arith.constant dense<0.000000e+00> : vector<16x96xf32>
    %17 = tpu.matmul %14, %16, %cst {dimension_numbers = #tpu.dot_dimension_numbers<[1], [0], [0], [1], [0, 0, 1, 1], [], []>} : vector<16x32xbf16>, vector<32x96xbf16>, vector<16x96xf32> -> vector<16x96xf32>
    %18 = vector.broadcast %6 : vector<1x96xf32> to vector<16x96xf32>
    %19 = arith.addf %17, %18 : vector<16x96xf32>
    %20 = vector.extract_strided_slice %19 {offsets = [0, 0], sizes = [16, 32], strides = [1, 1]} : vector<16x96xf32> to vector<16x32xf32>
    %21 = arith.truncf %20 : vector<16x32xf32> to vector<16x32xbf16>
    %22 = vector.extract_strided_slice %19 {offsets = [0, 32], sizes = [16, 32], strides = [1, 1]} : vector<16x96xf32> to vector<16x32xf32>
    %23 = arith.truncf %22 : vector<16x32xf32> to vector<16x32xbf16>
    %24 = vector.extract_strided_slice %19 {offsets = [0, 64], sizes = [16, 32], strides = [1, 1]} : vector<16x96xf32> to vector<16x32xf32>
    %25 = arith.truncf %24 : vector<16x32xf32> to vector<16x32xbf16>
    %c0_8 = arith.constant 0 : index
    %c0_9 = arith.constant 0 : index
    %26 = vector.load %arg4[%c0_8, %c0_9] : memref<8x8xf32, #tpu.memory_space<vmem>>, vector<8x8xf32>
    %27 = vector.extract_strided_slice %21 {offsets = [0, 0], sizes = [8, 8], strides = [1, 1]} : vector<16x32xbf16> to vector<8x8xbf16>
    %28 = vector.extract_strided_slice %23 {offsets = [0, 0], sizes = [8, 8], strides = [1, 1]} : vector<16x32xbf16> to vector<8x8xbf16>
    "tpu.trace_start"() <{level = 10 : i32, message = "qd,kd->qk"}> : () -> ()
    %cst_10 = arith.constant dense<0.000000e+00> : vector<8x8xf32>
    %29 = tpu.matmul %27, %28, %cst_10 {dimension_numbers = #tpu.dot_dimension_numbers<[1], [1], [0], [0], [0, 0, 1, 0], [], []>} : vector<8x8xbf16>, vector<8x8xbf16>, vector<8x8xf32> -> vector<8x8xf32>
    "tpu.trace_stop"() : () -> ()
    %30 = arith.addf %29, %26 : vector<8x8xf32>
    %cst_11 = arith.constant dense<0xFF800000> : vector<8xf32>
    %31 = vector.multi_reduction <maximumf>, %30, %cst_11 [1] : vector<8x8xf32> to vector<8xf32>
    %32 = vector.shape_cast %31 : vector<8xf32> to vector<8x1xf32>
    %33 = vector.broadcast %32 : vector<8x1xf32> to vector<8x8xf32>
    %34 = arith.subf %30, %33 : vector<8x8xf32>
    %35 = math.exp %34 : vector<8x8xf32>
    %cst_12 = arith.constant dense<0.000000e+00> : vector<8xf32>
    %36 = vector.multi_reduction <add>, %35, %cst_12 [1] : vector<8x8xf32> to vector<8xf32>
    %37 = vector.shape_cast %36 : vector<8xf32> to vector<8x1xf32>
    %38 = tpu.reciprocal %37 {approx = true} : vector<8x1xf32> -> vector<8x1xf32>
    %39 = arith.truncf %35 : vector<8x8xf32> to vector<8x8xbf16>
    %40 = vector.extract_strided_slice %25 {offsets = [0, 0], sizes = [8, 8], strides = [1, 1]} : vector<16x32xbf16> to vector<8x8xbf16>
    %cst_13 = arith.constant dense<0.000000e+00> : vector<8x8xf32>
    %41 = tpu.matmul %39, %40, %cst_13 {dimension_numbers = #tpu.dot_dimension_numbers<[1], [0], [0], [1], [0, 0, 1, 1], [], []>} : vector<8x8xbf16>, vector<8x8xbf16>, vector<8x8xf32> -> vector<8x8xf32>
    %42 = vector.broadcast %38 : vector<8x1xf32> to vector<8x8xf32>
    %43 = arith.mulf %41, %42 : vector<8x8xf32>
    %44 = arith.truncf %43 : vector<8x8xf32> to vector<8x8xbf16>
    %c0_14 = arith.constant 0 : index
    %c0_15 = arith.constant 0 : index
    %45 = vector.load %arg16[%c0_14, %c0_15] : memref<16x32xbf16, #tpu.memory_space<vmem>>, vector<8x8xbf16>
    tpu.vector_store %arg16[%c0_14, %c0_15], %44 {strides = array<i32>} : memref<16x32xbf16, #tpu.memory_space<vmem>>, vector<8x8xbf16>,
    %46 = vector.extract_strided_slice %21 {offsets = [0, 8], sizes = [8, 8], strides = [1, 1]} : vector<16x32xbf16> to vector<8x8xbf16>
    %47 = vector.extract_strided_slice %23 {offsets = [0, 8], sizes = [8, 8], strides = [1, 1]} : vector<16x32xbf16> to vector<8x8xbf16>
    "tpu.trace_start"() <{level = 10 : i32, message = "qd,kd->qk"}> : () -> ()
    %cst_16 = arith.constant dense<0.000000e+00> : vector<8x8xf32>
    %48 = tpu.matmul %46, %47, %cst_16 {dimension_numbers = #tpu.dot_dimension_numbers<[1], [1], [0], [0], [0, 0, 1, 0], [], []>} : vector<8x8xbf16>, vector<8x8xbf16>, vector<8x8xf32> -> vector<8x8xf32>
    "tpu.trace_stop"() : () -> ()
    %49 = arith.addf %48, %26 : vector<8x8xf32>
    %cst_17 = arith.constant dense<0xFF800000> : vector<8xf32>
    %50 = vector.multi_reduction <maximumf>, %49, %cst_17 [1] : vector<8x8xf32> to vector<8xf32>
    %51 = vector.shape_cast %50 : vector<8xf32> to vector<8x1xf32>
    %52 = vector.broadcast %51 : vector<8x1xf32> to vector<8x8xf32>
    %53 = arith.subf %49, %52 : vector<8x8xf32>
    %54 = math.exp %53 : vector<8x8xf32>
    %cst_18 = arith.constant dense<0.000000e+00> : vector<8xf32>
    %55 = vector.multi_reduction <add>, %54, %cst_18 [1] : vector<8x8xf32> to vector<8xf32>
    %56 = vector.shape_cast %55 : vector<8xf32> to vector<8x1xf32>
    %57 = tpu.reciprocal %56 {approx = true} : vector<8x1xf32> -> vector<8x1xf32>
    %58 = arith.truncf %54 : vector<8x8xf32> to vector<8x8xbf16>
    %59 = vector.extract_strided_slice %25 {offsets = [0, 8], sizes = [8, 8], strides = [1, 1]} : vector<16x32xbf16> to vector<8x8xbf16>
    %cst_19 = arith.constant dense<0.000000e+00> : vector<8x8xf32>
    %60 = tpu.matmul %58, %59, %cst_19 {dimension_numbers = #tpu.dot_dimension_numbers<[1], [0], [0], [1], [0, 0, 1, 1], [], []>} : vector<8x8xbf16>, vector<8x8xbf16>, vector<8x8xf32> -> vector<8x8xf32>
    %61 = vector.broadcast %57 : vector<8x1xf32> to vector<8x8xf32>
    %62 = arith.mulf %60, %61 : vector<8x8xf32>
    %63 = arith.truncf %62 : vector<8x8xf32> to vector<8x8xbf16>
    %c0_20 = arith.constant 0 : index
    %c8 = arith.constant 8 : index
    %64 = vector.load %arg16[%c0_20, %c8] : memref<16x32xbf16, #tpu.memory_space<vmem>>, vector<8x8xbf16>
    tpu.vector_store %arg16[%c0_20, %c8], %63 {strides = array<i32>} : memref<16x32xbf16, #tpu.memory_space<vmem>>, vector<8x8xbf16>,
    %65 = vector.extract_strided_slice %21 {offsets = [0, 16], sizes = [8, 8], strides = [1, 1]} : vector<16x32xbf16> to vector<8x8xbf16>
    %66 = vector.extract_strided_slice %23 {offsets = [0, 16], sizes = [8, 8], strides = [1, 1]} : vector<16x32xbf16> to vector<8x8xbf16>
    "tpu.trace_start"() <{level = 10 : i32, message = "qd,kd->qk"}> : () -> ()
    %cst_21 = arith.constant dense<0.000000e+00> : vector<8x8xf32>
    %67 = tpu.matmul %65, %66, %cst_21 {dimension_numbers = #tpu.dot_dimension_numbers<[1], [1], [0], [0], [0, 0, 1, 0], [], []>} : vector<8x8xbf16>, vector<8x8xbf16>, vector<8x8xf32> -> vector<8x8xf32>
    "tpu.trace_stop"() : () -> ()
    %68 = arith.addf %67, %26 : vector<8x8xf32>
    %cst_22 = arith.constant dense<0xFF800000> : vector<8xf32>
    %69 = vector.multi_reduction <maximumf>, %68, %cst_22 [1] : vector<8x8xf32> to vector<8xf32>
    %70 = vector.shape_cast %69 : vector<8xf32> to vector<8x1xf32>
    %71 = vector.broadcast %70 : vector<8x1xf32> to vector<8x8xf32>
    %72 = arith.subf %68, %71 : vector<8x8xf32>
    %73 = math.exp %72 : vector<8x8xf32>
    %cst_23 = arith.constant dense<0.000000e+00> : vector<8xf32>
    %74 = vector.multi_reduction <add>, %73, %cst_23 [1] : vector<8x8xf32> to vector<8xf32>
    %75 = vector.shape_cast %74 : vector<8xf32> to vector<8x1xf32>
    %76 = tpu.reciprocal %75 {approx = true} : vector<8x1xf32> -> vector<8x1xf32>
    %77 = arith.truncf %73 : vector<8x8xf32> to vector<8x8xbf16>
    %78 = vector.extract_strided_slice %25 {offsets = [0, 16], sizes = [8, 8], strides = [1, 1]} : vector<16x32xbf16> to vector<8x8xbf16>
    %cst_24 = arith.constant dense<0.000000e+00> : vector<8x8xf32>
    %79 = tpu.matmul %77, %78, %cst_24 {dimension_numbers = #tpu.dot_dimension_numbers<[1], [0], [0], [1], [0, 0, 1, 1], [], []>} : vector<8x8xbf16>, vector<8x8xbf16>, vector<8x8xf32> -> vector<8x8xf32>
    %80 = vector.broadcast %76 : vector<8x1xf32> to vector<8x8xf32>
    %81 = arith.mulf %79, %80 : vector<8x8xf32>
    %82 = arith.truncf %81 : vector<8x8xf32> to vector<8x8xbf16>
    %c0_25 = arith.constant 0 : index
    %c16 = arith.constant 16 : index
    %83 = vector.load %arg16[%c0_25, %c16] : memref<16x32xbf16, #tpu.memory_space<vmem>>, vector<8x8xbf16>
    tpu.vector_store %arg16[%c0_25, %c16], %82 {strides = array<i32>} : memref<16x32xbf16, #tpu.memory_space<vmem>>, vector<8x8xbf16>,
    %84 = vector.extract_strided_slice %21 {offsets = [0, 24], sizes = [8, 8], strides = [1, 1]} : vector<16x32xbf16> to vector<8x8xbf16>
    %85 = vector.extract_strided_slice %23 {offsets = [0, 24], sizes = [8, 8], strides = [1, 1]} : vector<16x32xbf16> to vector<8x8xbf16>
    "tpu.trace_start"() <{level = 10 : i32, message = "qd,kd->qk"}> : () -> ()
    %cst_26 = arith.constant dense<0.000000e+00> : vector<8x8xf32>
    %86 = tpu.matmul %84, %85, %cst_26 {dimension_numbers = #tpu.dot_dimension_numbers<[1], [1], [0], [0], [0, 0, 1, 0], [], []>} : vector<8x8xbf16>, vector<8x8xbf16>, vector<8x8xf32> -> vector<8x8xf32>
    "tpu.trace_stop"() : () -> ()
    %87 = arith.addf %86, %26 : vector<8x8xf32>
    %cst_27 = arith.constant dense<0xFF800000> : vector<8xf32>
    %88 = vector.multi_reduction <maximumf>, %87, %cst_27 [1] : vector<8x8xf32> to vector<8xf32>
    %89 = vector.shape_cast %88 : vector<8xf32> to vector<8x1xf32>
    %90 = vector.broadcast %89 : vector<8x1xf32> to vector<8x8xf32>
    %91 = arith.subf %87, %90 : vector<8x8xf32>
    %92 = math.exp %91 : vector<8x8xf32>
    %cst_28 = arith.constant dense<0.000000e+00> : vector<8xf32>
    %93 = vector.multi_reduction <add>, %92, %cst_28 [1] : vector<8x8xf32> to vector<8xf32>
    %94 = vector.shape_cast %93 : vector<8xf32> to vector<8x1xf32>
    %95 = tpu.reciprocal %94 {approx = true} : vector<8x1xf32> -> vector<8x1xf32>
    %96 = arith.truncf %92 : vector<8x8xf32> to vector<8x8xbf16>
    %97 = vector.extract_strided_slice %25 {offsets = [0, 24], sizes = [8, 8], strides = [1, 1]} : vector<16x32xbf16> to vector<8x8xbf16>
    %cst_29 = arith.constant dense<0.000000e+00> : vector<8x8xf32>
    %98 = tpu.matmul %96, %97, %cst_29 {dimension_numbers = #tpu.dot_dimension_numbers<[1], [0], [0], [1], [0, 0, 1, 1], [], []>} : vector<8x8xbf16>, vector<8x8xbf16>, vector<8x8xf32> -> vector<8x8xf32>
    %99 = vector.broadcast %95 : vector<8x1xf32> to vector<8x8xf32>
    %100 = arith.mulf %98, %99 : vector<8x8xf32>
    %101 = arith.truncf %100 : vector<8x8xf32> to vector<8x8xbf16>
    %c0_30 = arith.constant 0 : index
    %c24 = arith.constant 24 : index
    %102 = vector.load %arg16[%c0_30, %c24] : memref<16x32xbf16, #tpu.memory_space<vmem>>, vector<8x8xbf16>
    tpu.vector_store %arg16[%c0_30, %c24], %101 {strides = array<i32>} : memref<16x32xbf16, #tpu.memory_space<vmem>>, vector<8x8xbf16>,
    %103 = vector.extract_strided_slice %21 {offsets = [8, 0], sizes = [8, 8], strides = [1, 1]} : vector<16x32xbf16> to vector<8x8xbf16>
    %104 = vector.extract_strided_slice %23 {offsets = [8, 0], sizes = [8, 8], strides = [1, 1]} : vector<16x32xbf16> to vector<8x8xbf16>
    "tpu.trace_start"() <{level = 10 : i32, message = "qd,kd->qk"}> : () -> ()
    %cst_31 = arith.constant dense<0.000000e+00> : vector<8x8xf32>
    %105 = tpu.matmul %103, %104, %cst_31 {dimension_numbers = #tpu.dot_dimension_numbers<[1], [1], [0], [0], [0, 0, 1, 0], [], []>} : vector<8x8xbf16>, vector<8x8xbf16>, vector<8x8xf32> -> vector<8x8xf32>
    "tpu.trace_stop"() : () -> ()
    %106 = arith.addf %105, %26 : vector<8x8xf32>
    %cst_32 = arith.constant dense<0xFF800000> : vector<8xf32>
    %107 = vector.multi_reduction <maximumf>, %106, %cst_32 [1] : vector<8x8xf32> to vector<8xf32>
    %108 = vector.shape_cast %107 : vector<8xf32> to vector<8x1xf32>
    %109 = vector.broadcast %108 : vector<8x1xf32> to vector<8x8xf32>
    %110 = arith.subf %106, %109 : vector<8x8xf32>
    %111 = math.exp %110 : vector<8x8xf32>
    %cst_33 = arith.constant dense<0.000000e+00> : vector<8xf32>
    %112 = vector.multi_reduction <add>, %111, %cst_33 [1] : vector<8x8xf32> to vector<8xf32>
    %113 = vector.shape_cast %112 : vector<8xf32> to vector<8x1xf32>
    %114 = tpu.reciprocal %113 {approx = true} : vector<8x1xf32> -> vector<8x1xf32>
    %115 = arith.truncf %111 : vector<8x8xf32> to vector<8x8xbf16>
    %116 = vector.extract_strided_slice %25 {offsets = [8, 0], sizes = [8, 8], strides = [1, 1]} : vector<16x32xbf16> to vector<8x8xbf16>
    %cst_34 = arith.constant dense<0.000000e+00> : vector<8x8xf32>
    %117 = tpu.matmul %115, %116, %cst_34 {dimension_numbers = #tpu.dot_dimension_numbers<[1], [0], [0], [1], [0, 0, 1, 1], [], []>} : vector<8x8xbf16>, vector<8x8xbf16>, vector<8x8xf32> -> vector<8x8xf32>
    %118 = vector.broadcast %114 : vector<8x1xf32> to vector<8x8xf32>
    %119 = arith.mulf %117, %118 : vector<8x8xf32>
    %120 = arith.truncf %119 : vector<8x8xf32> to vector<8x8xbf16>
    %c8_35 = arith.constant 8 : index
    %c0_36 = arith.constant 0 : index
    %121 = vector.load %arg16[%c8_35, %c0_36] : memref<16x32xbf16, #tpu.memory_space<vmem>>, vector<8x8xbf16>
    tpu.vector_store %arg16[%c8_35, %c0_36], %120 {strides = array<i32>} : memref<16x32xbf16, #tpu.memory_space<vmem>>, vector<8x8xbf16>,
    %122 = vector.extract_strided_slice %21 {offsets = [8, 8], sizes = [8, 8], strides = [1, 1]} : vector<16x32xbf16> to vector<8x8xbf16>
    %123 = vector.extract_strided_slice %23 {offsets = [8, 8], sizes = [8, 8], strides = [1, 1]} : vector<16x32xbf16> to vector<8x8xbf16>
    "tpu.trace_start"() <{level = 10 : i32, message = "qd,kd->qk"}> : () -> ()
    %cst_37 = arith.constant dense<0.000000e+00> : vector<8x8xf32>
    %124 = tpu.matmul %122, %123, %cst_37 {dimension_numbers = #tpu.dot_dimension_numbers<[1], [1], [0], [0], [0, 0, 1, 0], [], []>} : vector<8x8xbf16>, vector<8x8xbf16>, vector<8x8xf32> -> vector<8x8xf32>
    "tpu.trace_stop"() : () -> ()
    %125 = arith.addf %124, %26 : vector<8x8xf32>
    %cst_38 = arith.constant dense<0xFF800000> : vector<8xf32>
    %126 = vector.multi_reduction <maximumf>, %125, %cst_38 [1] : vector<8x8xf32> to vector<8xf32>
    %127 = vector.shape_cast %126 : vector<8xf32> to vector<8x1xf32>
    %128 = vector.broadcast %127 : vector<8x1xf32> to vector<8x8xf32>
    %129 = arith.subf %125, %128 : vector<8x8xf32>
    %130 = math.exp %129 : vector<8x8xf32>
    %cst_39 = arith.constant dense<0.000000e+00> : vector<8xf32>
    %131 = vector.multi_reduction <add>, %130, %cst_39 [1] : vector<8x8xf32> to vector<8xf32>
    %132 = vector.shape_cast %131 : vector<8xf32> to vector<8x1xf32>
    %133 = tpu.reciprocal %132 {approx = true} : vector<8x1xf32> -> vector<8x1xf32>
    %134 = arith.truncf %130 : vector<8x8xf32> to vector<8x8xbf16>
    %135 = vector.extract_strided_slice %25 {offsets = [8, 8], sizes = [8, 8], strides = [1, 1]} : vector<16x32xbf16> to vector<8x8xbf16>
    %cst_40 = arith.constant dense<0.000000e+00> : vector<8x8xf32>
    %136 = tpu.matmul %134, %135, %cst_40 {dimension_numbers = #tpu.dot_dimension_numbers<[1], [0], [0], [1], [0, 0, 1, 1], [], []>} : vector<8x8xbf16>, vector<8x8xbf16>, vector<8x8xf32> -> vector<8x8xf32>
    %137 = vector.broadcast %133 : vector<8x1xf32> to vector<8x8xf32>
    %138 = arith.mulf %136, %137 : vector<8x8xf32>
    %139 = arith.truncf %138 : vector<8x8xf32> to vector<8x8xbf16>
    %c8_41 = arith.constant 8 : index
    %c8_42 = arith.constant 8 : index
    %140 = vector.load %arg16[%c8_41, %c8_42] : memref<16x32xbf16, #tpu.memory_space<vmem>>, vector<8x8xbf16>
    tpu.vector_store %arg16[%c8_41, %c8_42], %139 {strides = array<i32>} : memref<16x32xbf16, #tpu.memory_space<vmem>>, vector<8x8xbf16>,
    %141 = vector.extract_strided_slice %21 {offsets = [8, 16], sizes = [8, 8], strides = [1, 1]} : vector<16x32xbf16> to vector<8x8xbf16>
    %142 = vector.extract_strided_slice %23 {offsets = [8, 16], sizes = [8, 8], strides = [1, 1]} : vector<16x32xbf16> to vector<8x8xbf16>
    "tpu.trace_start"() <{level = 10 : i32, message = "qd,kd->qk"}> : () -> ()
    %cst_43 = arith.constant dense<0.000000e+00> : vector<8x8xf32>
    %143 = tpu.matmul %141, %142, %cst_43 {dimension_numbers = #tpu.dot_dimension_numbers<[1], [1], [0], [0], [0, 0, 1, 0], [], []>} : vector<8x8xbf16>, vector<8x8xbf16>, vector<8x8xf32> -> vector<8x8xf32>
    "tpu.trace_stop"() : () -> ()
    %144 = arith.addf %143, %26 : vector<8x8xf32>
    %cst_44 = arith.constant dense<0xFF800000> : vector<8xf32>
    %145 = vector.multi_reduction <maximumf>, %144, %cst_44 [1] : vector<8x8xf32> to vector<8xf32>
    %146 = vector.shape_cast %145 : vector<8xf32> to vector<8x1xf32>
    %147 = vector.broadcast %146 : vector<8x1xf32> to vector<8x8xf32>
    %148 = arith.subf %144, %147 : vector<8x8xf32>
    %149 = math.exp %148 : vector<8x8xf32>
    %cst_45 = arith.constant dense<0.000000e+00> : vector<8xf32>
    %150 = vector.multi_reduction <add>, %149, %cst_45 [1] : vector<8x8xf32> to vector<8xf32>
    %151 = vector.shape_cast %150 : vector<8xf32> to vector<8x1xf32>
    %152 = tpu.reciprocal %151 {approx = true} : vector<8x1xf32> -> vector<8x1xf32>
    %153 = arith.truncf %149 : vector<8x8xf32> to vector<8x8xbf16>
    %154 = vector.extract_strided_slice %25 {offsets = [8, 16], sizes = [8, 8], strides = [1, 1]} : vector<16x32xbf16> to vector<8x8xbf16>
    %cst_46 = arith.constant dense<0.000000e+00> : vector<8x8xf32>
    %155 = tpu.matmul %153, %154, %cst_46 {dimension_numbers = #tpu.dot_dimension_numbers<[1], [0], [0], [1], [0, 0, 1, 1], [], []>} : vector<8x8xbf16>, vector<8x8xbf16>, vector<8x8xf32> -> vector<8x8xf32>
    %156 = vector.broadcast %152 : vector<8x1xf32> to vector<8x8xf32>
    %157 = arith.mulf %155, %156 : vector<8x8xf32>
    %158 = arith.truncf %157 : vector<8x8xf32> to vector<8x8xbf16>
    %c8_47 = arith.constant 8 : index
    %c16_48 = arith.constant 16 : index
    %159 = vector.load %arg16[%c8_47, %c16_48] : memref<16x32xbf16, #tpu.memory_space<vmem>>, vector<8x8xbf16>
    tpu.vector_store %arg16[%c8_47, %c16_48], %158 {strides = array<i32>} : memref<16x32xbf16, #tpu.memory_space<vmem>>, vector<8x8xbf16>,
    %160 = vector.extract_strided_slice %21 {offsets = [8, 24], sizes = [8, 8], strides = [1, 1]} : vector<16x32xbf16> to vector<8x8xbf16>
    %161 = vector.extract_strided_slice %23 {offsets = [8, 24], sizes = [8, 8], strides = [1, 1]} : vector<16x32xbf16> to vector<8x8xbf16>
    "tpu.trace_start"() <{level = 10 : i32, message = "qd,kd->qk"}> : () -> ()
    %cst_49 = arith.constant dense<0.000000e+00> : vector<8x8xf32>
    %162 = tpu.matmul %160, %161, %cst_49 {dimension_numbers = #tpu.dot_dimension_numbers<[1], [1], [0], [0], [0, 0, 1, 0], [], []>} : vector<8x8xbf16>, vector<8x8xbf16>, vector<8x8xf32> -> vector<8x8xf32>
    "tpu.trace_stop"() : () -> ()
    %163 = arith.addf %162, %26 : vector<8x8xf32>
    %cst_50 = arith.constant dense<0xFF800000> : vector<8xf32>
    %164 = vector.multi_reduction <maximumf>, %163, %cst_50 [1] : vector<8x8xf32> to vector<8xf32>
    %165 = vector.shape_cast %164 : vector<8xf32> to vector<8x1xf32>
    %166 = vector.broadcast %165 : vector<8x1xf32> to vector<8x8xf32>
    %167 = arith.subf %163, %166 : vector<8x8xf32>
    %168 = math.exp %167 : vector<8x8xf32>
    %cst_51 = arith.constant dense<0.000000e+00> : vector<8xf32>
    %169 = vector.multi_reduction <add>, %168, %cst_51 [1] : vector<8x8xf32> to vector<8xf32>
    %170 = vector.shape_cast %169 : vector<8xf32> to vector<8x1xf32>
    %171 = tpu.reciprocal %170 {approx = true} : vector<8x1xf32> -> vector<8x1xf32>
    %172 = arith.truncf %168 : vector<8x8xf32> to vector<8x8xbf16>
    %173 = vector.extract_strided_slice %25 {offsets = [8, 24], sizes = [8, 8], strides = [1, 1]} : vector<16x32xbf16> to vector<8x8xbf16>
    %cst_52 = arith.constant dense<0.000000e+00> : vector<8x8xf32>
    %174 = tpu.matmul %172, %173, %cst_52 {dimension_numbers = #tpu.dot_dimension_numbers<[1], [0], [0], [1], [0, 0, 1, 1], [], []>} : vector<8x8xbf16>, vector<8x8xbf16>, vector<8x8xf32> -> vector<8x8xf32>
    %175 = vector.broadcast %171 : vector<8x1xf32> to vector<8x8xf32>
    %176 = arith.mulf %174, %175 : vector<8x8xf32>
    %177 = arith.truncf %176 : vector<8x8xf32> to vector<8x8xbf16>
    %c8_53 = arith.constant 8 : index
    %c24_54 = arith.constant 24 : index
    %178 = vector.load %arg16[%c8_53, %c24_54] : memref<16x32xbf16, #tpu.memory_space<vmem>>, vector<8x8xbf16>
    tpu.vector_store %arg16[%c8_53, %c24_54], %177 {strides = array<i32>} : memref<16x32xbf16, #tpu.memory_space<vmem>>, vector<8x8xbf16>,
    %c0_55 = arith.constant 0 : index
    %c0_56 = arith.constant 0 : index
    %179 = vector.load %arg16[%c0_55, %c0_56] : memref<16x32xbf16, #tpu.memory_space<vmem>>, vector<16x32xbf16>
    %c0_57 = arith.constant 0 : index
    %c0_58 = arith.constant 0 : index
    %c0_59 = arith.constant 0 : index
    %180 = vector.load %arg8[%c0_57, %c0_58, %c0_59] : memref<1x32x32xbf16, #tpu.memory_space<vmem>>, vector<1x32x32xbf16>
    %181 = vector.shape_cast %180 : vector<1x32x32xbf16> to vector<32x32xbf16>
    %cst_60 = arith.constant dense<0.000000e+00> : vector<16x32xf32>
    %182 = tpu.matmul %179, %181, %cst_60 {dimension_numbers = #tpu.dot_dimension_numbers<[1], [0], [0], [1], [0, 0, 1, 1], [], []>} : vector<16x32xbf16>, vector<32x32xbf16>, vector<16x32xf32> -> vector<16x32xf32>
    %183 = vector.broadcast %7 : vector<1x32xf32> to vector<16x32xf32>
    %184 = arith.addf %182, %183 : vector<16x32xf32>
    %185 = arith.addf %3, %184 : vector<16x32xf32>
    %cst_61 = arith.constant dense<0.000000e+00> : vector<16xf32>
    %186 = vector.multi_reduction <add>, %185, %cst_61 [1] : vector<16x32xf32> to vector<16xf32>
    %187 = vector.shape_cast %186 : vector<16xf32> to vector<16x1xf32>
    %cst_62 = arith.constant 3.200000e+01 : f32
    %188 = vector.broadcast %cst_62 : f32 to vector<16x1xf32>
    %189 = arith.divf %187, %188 : vector<16x1xf32>
    %190 = vector.broadcast %189 : vector<16x1xf32> to vector<16x32xf32>
    %191 = arith.subf %185, %190 : vector<16x32xf32>
    %192 = arith.mulf %191, %191 : vector<16x32xf32>
    %cst_63 = arith.constant dense<0.000000e+00> : vector<16xf32>
    %193 = vector.multi_reduction <add>, %192, %cst_63 [1] : vector<16x32xf32> to vector<16xf32>
    %194 = vector.shape_cast %193 : vector<16xf32> to vector<16x1xf32>
    %cst_64 = arith.constant 3.200000e+01 : f32
    %195 = vector.broadcast %cst_64 : f32 to vector<16x1xf32>
    %196 = arith.divf %194, %195 : vector<16x1xf32>
    %197 = vector.broadcast %189 : vector<16x1xf32> to vector<16x32xf32>
    %198 = arith.subf %185, %197 : vector<16x32xf32>
    %cst_65 = arith.constant 9.99999974E-6 : f32
    %199 = vector.broadcast %cst_65 : f32 to vector<16x1xf32>
    %200 = arith.addf %196, %199 : vector<16x1xf32>
    %201 = math.rsqrt %200 : vector<16x1xf32>
    %202 = vector.broadcast %201 : vector<16x1xf32> to vector<16x32xf32>
    %203 = arith.mulf %198, %202 : vector<16x32xf32>
    %204 = vector.broadcast %10 : vector<1x32xf32> to vector<16x32xf32>
    %205 = arith.mulf %203, %204 : vector<16x32xf32>
    %206 = vector.broadcast %11 : vector<1x32xf32> to vector<16x32xf32>
    %207 = arith.addf %205, %206 : vector<16x32xf32>
    %208 = arith.truncf %207 : vector<16x32xf32> to vector<16x32xbf16>
    %c0_66 = arith.constant 0 : index
    %c0_67 = arith.constant 0 : index
    %c0_68 = arith.constant 0 : index
    %209 = vector.load %arg9[%c0_66, %c0_67, %c0_68] : memref<1x32x64xbf16, #tpu.memory_space<vmem>>, vector<1x32x64xbf16>
    %210 = vector.shape_cast %209 : vector<1x32x64xbf16> to vector<32x64xbf16>
    %cst_69 = arith.constant dense<0.000000e+00> : vector<16x64xf32>
    %211 = tpu.matmul %208, %210, %cst_69 {dimension_numbers = #tpu.dot_dimension_numbers<[1], [0], [0], [1], [0, 0, 1, 1], [], []>} : vector<16x32xbf16>, vector<32x64xbf16>, vector<16x64xf32> -> vector<16x64xf32>
    %212 = vector.broadcast %8 : vector<1x64xf32> to vector<16x64xf32>
    %213 = arith.addf %211, %212 : vector<16x64xf32>
    %cst_70 = arith.constant 0.000000e+00 : f32
    %214 = vector.broadcast %cst_70 : f32 to vector<16x64xf32>
    %215 = arith.maximumf %213, %214 : vector<16x64xf32>
    %216 = arith.truncf %215 : vector<16x64xf32> to vector<16x64xbf16>
    %c0_71 = arith.constant 0 : index
    %c0_72 = arith.constant 0 : index
    %c0_73 = arith.constant 0 : index
    %217 = vector.load %arg10[%c0_71, %c0_72, %c0_73] : memref<1x64x32xbf16, #tpu.memory_space<vmem>>, vector<1x64x32xbf16>
    %218 = vector.shape_cast %217 : vector<1x64x32xbf16> to vector<64x32xbf16>
    %cst_74 = arith.constant dense<0.000000e+00> : vector<16x32xf32>
    %219 = tpu.matmul %216, %218, %cst_74 {dimension_numbers = #tpu.dot_dimension_numbers<[1], [0], [0], [1], [0, 0, 1, 1], [], []>} : vector<16x64xbf16>, vector<64x32xbf16>, vector<16x32xf32> -> vector<16x32xf32>
    %220 = vector.broadcast %9 : vector<1x32xf32> to vector<16x32xf32>
    %221 = arith.addf %219, %220 : vector<16x32xf32>
    %222 = arith.addf %207, %221 : vector<16x32xf32>
    %cst_75 = arith.constant dense<0.000000e+00> : vector<16xf32>
    %223 = vector.multi_reduction <add>, %222, %cst_75 [1] : vector<16x32xf32> to vector<16xf32>
    %224 = vector.shape_cast %223 : vector<16xf32> to vector<16x1xf32>
    %cst_76 = arith.constant 3.200000e+01 : f32
    %225 = vector.broadcast %cst_76 : f32 to vector<16x1xf32>
    %226 = arith.divf %224, %225 : vector<16x1xf32>
    %227 = vector.broadcast %226 : vector<16x1xf32> to vector<16x32xf32>
    %228 = arith.subf %222, %227 : vector<16x32xf32>
    %229 = arith.mulf %228, %228 : vector<16x32xf32>
    %cst_77 = arith.constant dense<0.000000e+00> : vector<16xf32>
    %230 = vector.multi_reduction <add>, %229, %cst_77 [1] : vector<16x32xf32> to vector<16xf32>
    %231 = vector.shape_cast %230 : vector<16xf32> to vector<16x1xf32>
    %cst_78 = arith.constant 3.200000e+01 : f32
    %232 = vector.broadcast %cst_78 : f32 to vector<16x1xf32>
    %233 = arith.divf %231, %232 : vector<16x1xf32>
    %234 = vector.broadcast %226 : vector<16x1xf32> to vector<16x32xf32>
    %235 = arith.subf %222, %234 : vector<16x32xf32>
    %cst_79 = arith.constant 9.99999974E-6 : f32
    %236 = vector.broadcast %cst_79 : f32 to vector<16x1xf32>
    %237 = arith.addf %233, %236 : vector<16x1xf32>
    %238 = math.rsqrt %237 : vector<16x1xf32>
    %239 = vector.broadcast %238 : vector<16x1xf32> to vector<16x32xf32>
    %240 = arith.mulf %235, %239 : vector<16x32xf32>
    %241 = vector.broadcast %12 : vector<1x32xf32> to vector<16x32xf32>
    %242 = arith.mulf %240, %241 : vector<16x32xf32>
    %243 = vector.broadcast %13 : vector<1x32xf32> to vector<16x32xf32>
    %244 = arith.addf %242, %243 : vector<16x32xf32>
    %c0_80 = arith.constant 0 : index
    %c0_81 = arith.constant 0 : index
    %245 = vector.load %arg15[%c0_80, %c0_81] : memref<16x32xf32, #tpu.memory_space<vmem>>, vector<16x32xf32>
    tpu.vector_store %arg15[%c0_80, %c0_81], %244 {strides = array<i32>} : memref<16x32xf32, #tpu.memory_space<vmem>>, vector<16x32xf32>,
    %c1_i32 = arith.constant 1 : i32
    %246 = arith.cmpi eq, %arg1, %c1_i32 : i32
    %247 = arith.extui %246 : i1 to i32
    %c0_i32_82 = arith.constant 0 : i32
    %248 = arith.cmpi ne, %247, %c0_i32_82 : i32
    scf.if %248 {
      %c0_83 = arith.constant 0 : index
      %c0_84 = arith.constant 0 : index
      %249 = vector.load %arg12[%c0_83, %c0_84] : memref<32x4xbf16, #tpu.memory_space<vmem>>, vector<32x4xbf16>
      %c0_85 = arith.constant 0 : index
      %c0_86 = arith.constant 0 : index
      %250 = vector.load %arg13[%c0_85, %c0_86] : memref<1x4xf32, #tpu.memory_space<vmem>>, vector<1x4xf32>
      %251 = vector.extract_strided_slice %244 {offsets = [4, 0], sizes = [4, 32], strides = [1, 1]} : vector<16x32xf32> to vector<4x32xf32>
      %252 = arith.truncf %251 : vector<4x32xf32> to vector<4x32xbf16>
      %cst_87 = arith.constant dense<0.000000e+00> : vector<4x4xf32>
      %253 = tpu.matmul %252, %249, %cst_87 {dimension_numbers = #tpu.dot_dimension_numbers<[1], [0], [0], [1], [0, 0, 1, 1], [], []>} : vector<4x32xbf16>, vector<32x4xbf16>, vector<4x4xf32> -> vector<4x4xf32>
      %254 = vector.broadcast %250 : vector<1x4xf32> to vector<4x4xf32>
      %255 = arith.addf %253, %254 : vector<4x4xf32>
      %c0_88 = arith.constant 0 : index
      %c0_89 = arith.constant 0 : index
      %c0_90 = arith.constant 0 : index
      %256 = vector.load %arg14[%c0_88, %c0_89, %c0_90] : memref<2x4x4xf32, #tpu.memory_space<vmem>>, vector<1x4x4xf32>
      %257 = vector.shape_cast %256 : vector<1x4x4xf32> to vector<4x4xf32>
      %258 = vector.shape_cast %255 : vector<4x4xf32> to vector<1x4x4xf32>
      tpu.vector_store %arg14[%c0_88, %c0_89, %c0_90], %258 {strides = array<i32>} : memref<2x4x4xf32, #tpu.memory_space<vmem>>, vector<1x4x4xf32>,
      %259 = vector.extract_strided_slice %244 {offsets = [12, 0], sizes = [4, 32], strides = [1, 1]} : vector<16x32xf32> to vector<4x32xf32>
      %260 = arith.truncf %259 : vector<4x32xf32> to vector<4x32xbf16>
      %cst_91 = arith.constant dense<0.000000e+00> : vector<4x4xf32>
      %261 = tpu.matmul %260, %249, %cst_91 {dimension_numbers = #tpu.dot_dimension_numbers<[1], [0], [0], [1], [0, 0, 1, 1], [], []>} : vector<4x32xbf16>, vector<32x4xbf16>, vector<4x4xf32> -> vector<4x4xf32>
      %262 = vector.broadcast %250 : vector<1x4xf32> to vector<4x4xf32>
      %263 = arith.addf %261, %262 : vector<4x4xf32>
      %c1 = arith.constant 1 : index
      %c0_92 = arith.constant 0 : index
      %c0_93 = arith.constant 0 : index
      %264 = vector.load %arg14[%c1, %c0_92, %c0_93] : memref<2x4x4xf32, #tpu.memory_space<vmem>>, vector<1x4x4xf32>
      %265 = vector.shape_cast %264 : vector<1x4x4xf32> to vector<4x4xf32>
      %266 = vector.shape_cast %263 : vector<4x4xf32> to vector<1x4x4xf32>
      tpu.vector_store %arg14[%c1, %c0_92, %c0_93], %266 {strides = array<i32>} : memref<2x4x4xf32, #tpu.memory_space<vmem>>, vector<1x4x4xf32>,
    } else {
    }
    return
  }
  func.func @transform_0(%arg0: i32, %arg1: i32) -> (i32, i32, i32) {
    %c0_i32 = arith.constant 0 : i32
    %c0_i32_0 = arith.constant 0 : i32
    %c0_i32_1 = arith.constant 0 : i32
    return %arg0, %c0_i32, %c0_i32_0 : i32, i32, i32
  }
  func.func @transform_1(%arg0: i32, %arg1: i32) -> (i32, i32, i32) {
    %c0_i32 = arith.constant 0 : i32
    %c0_i32_0 = arith.constant 0 : i32
    %c0_i32_1 = arith.constant 0 : i32
    return %arg0, %c0_i32, %c0_i32_0 : i32, i32, i32
  }
  func.func @transform_2(%arg0: i32, %arg1: i32) -> (i32, i32) {
    %c0_i32 = arith.constant 0 : i32
    %c0_i32_0 = arith.constant 0 : i32
    %c0_i32_1 = arith.constant 0 : i32
    return %c0_i32, %c0_i32_0 : i32, i32
  }
  func.func @transform_3(%arg0: i32, %arg1: i32) -> (i32, i32) {
    %c0_i32 = arith.constant 0 : i32
    %c0_i32_0 = arith.constant 0 : i32
    %c0_i32_1 = arith.constant 0 : i32
    return %c0_i32, %c0_i32_0 : i32, i32
  }
  func.func @transform_4(%arg0: i32, %arg1: i32) -> (i32, i32) {
    %c0_i32 = arith.constant 0 : i32
    %c0_i32_0 = arith.constant 0 : i32
    %c0_i32_1 = arith.constant 0 : i32
    return %c0_i32, %c0_i32_0 : i32, i32
  }
  func.func @transform_5(%arg0: i32, %arg1: i32) -> (i32, i32, i32) {
    %c0_i32 = arith.constant 0 : i32
    %c0_i32_0 = arith.constant 0 : i32
    %c0_i32_1 = arith.constant 0 : i32
    return %arg1, %c0_i32, %c0_i32_0 : i32, i32, i32
  }
  func.func @transform_6(%arg0: i32, %arg1: i32) -> (i32, i32, i32) {
    %c0_i32 = arith.constant 0 : i32
    %c0_i32_0 = arith.constant 0 : i32
    %c0_i32_1 = arith.constant 0 : i32
    return %arg1, %c0_i32, %c0_i32_0 : i32, i32, i32
  }
  func.func @transform_7(%arg0: i32, %arg1: i32) -> (i32, i32, i32) {
    %c0_i32 = arith.constant 0 : i32
    %c0_i32_0 = arith.constant 0 : i32
    %c0_i32_1 = arith.constant 0 : i32
    return %arg1, %c0_i32, %c0_i32_0 : i32, i32, i32
  }
  func.func @transform_8(%arg0: i32, %arg1: i32) -> (i32, i32, i32) {
    %c0_i32 = arith.constant 0 : i32
    %c0_i32_0 = arith.constant 0 : i32
    %c0_i32_1 = arith.constant 0 : i32
    return %arg1, %c0_i32, %c0_i32_0 : i32, i32, i32
  }
  func.func @transform_9(%arg0: i32, %arg1: i32) -> (i32, i32, i32) {
    %c0_i32 = arith.constant 0 : i32
    %c0_i32_0 = arith.constant 0 : i32
    %c0_i32_1 = arith.constant 0 : i32
    return %arg1, %c0_i32, %c0_i32_0 : i32, i32, i32
  }
  func.func @transform_10(%arg0: i32, %arg1: i32) -> (i32, i32) {
    %c0_i32 = arith.constant 0 : i32
    %c0_i32_0 = arith.constant 0 : i32
    %c0_i32_1 = arith.constant 0 : i32
    return %c0_i32, %c0_i32_0 : i32, i32
  }
  func.func @transform_11(%arg0: i32, %arg1: i32) -> (i32, i32) {
    %c0_i32 = arith.constant 0 : i32
    %c0_i32_0 = arith.constant 0 : i32
    %c0_i32_1 = arith.constant 0 : i32
    return %c0_i32, %c0_i32_0 : i32, i32
  }
  func.func @transform_12(%arg0: i32, %arg1: i32) -> (i32, i32, i32) {
    %c0_i32 = arith.constant 0 : i32
    %c0_i32_0 = arith.constant 0 : i32
    %c0_i32_1 = arith.constant 0 : i32
    return %arg0, %c0_i32, %c0_i32_0 : i32, i32, i32
  }
}

</mosaic_0001>

<llo_original>
// kernel: tst_forward.1
$region0: #{tst_forward.1}
  #allocation0 [shape = 'u32[]', space=smem, size = 0x4, offset = 0x4, fixed_abs, tag = 'smem constant byte address 0x4 - core index']
  #allocation1 [shape = 'u32[144,128]{1,0:T(1,128)}', space=vmem, size = 0x12000, scoped, tag = 'internal scratch']
  #allocation2 [shape = 'f32[16,32]{1,0:T(8,128)}', space=vmem, size = 0x2000, scoped, tag = 'scratch operand']
  #allocation3 [shape = 'bf16[16,32]{1,0:T(16,128)(2,1)}', space=vmem, size = 0x1000, scoped, tag = 'scratch operand']
  %s0 = inlined_call_operand.vmem [shape: f32[2,8,4], index: 0, kind: input, shape index: {}]
  %s1 = inlined_call_operand.vmem [shape: f32[2,8,32], index: 1, kind: input, shape index: {}]
  %s2 = inlined_call_operand.vmem [shape: f32[8,8], index: 2, kind: input, shape index: {}]
  %s3 = inlined_call_operand.vmem [shape: bf16[4,32], index: 3, kind: input, shape index: {}]
  %s4 = inlined_call_operand.vmem [shape: f32[1,32], index: 4, kind: input, shape index: {}]
  %s5 = inlined_call_operand.vmem [shape: bf16[2,32,96], index: 5, kind: input, shape index: {}]
  %s6 = inlined_call_operand.vmem [shape: bf16[2,32,32], index: 6, kind: input, shape index: {}]
  %s7 = inlined_call_operand.vmem [shape: bf16[2,32,64], index: 7, kind: input, shape index: {}]
  %s8 = inlined_call_operand.vmem [shape: bf16[2,64,32], index: 8, kind: input, shape index: {}]
  %s9 = inlined_call_operand.vmem [shape: f32[2,8,96], index: 9, kind: input, shape index: {}]
  %s10 = inlined_call_operand.vmem [shape: bf16[32,4], index: 10, kind: input, shape index: {}]
  %s11 = inlined_call_operand.vmem [shape: f32[1,4], index: 11, kind: input, shape index: {}]
  %s12 = inlined_call_operand.hbm [shape: f32[2,4,4], index: 12, kind: output, shape index: {}]
  %s13 = sld [smem:[#allocation0]]
  $region89: #{tst_forward.1} parent=0
    _
  %s15 = ssub.s32 1, %s13
  %s16 = scalar_select 0, %s15, %s13
  $region1: #{tst_forward.1} parent=0
    #allocation4 [shape = 'u8[4096]{0}', space=vmem, size = 0x1000, scoped, tag = 'output window, operand 0, single buffered']
    #allocation5 [shape = 's32[2]{0}', space=sflag, size = 0x8, scoped, tag = 'scoped memory for tst_forward.1']
    %17 = vsyncpa [#allocation5], 0
    loop: start=0, step=1, limit=4
    $region2: #{tst_forward.1} parent=1 // loop_pre_header
      _
    $region3: #{tst_forward.1} parent=1 // loop_header
      %s19 = sphi 0, %s23
      %p20 = scmp.ge.s32.totalorder %s19, 4
      %s26 = sphi 0, %s38
      %s27 = sphi 0, %s34
      %s28 = sphi 0, %s26
      %s29 = sphi 0, %s27
      %s30 = sphi 0, %s28
      %s31 = sphi 0, %s29
      %s41 = sphi 0, %s43
      %s44 = sphi 0, %s41
      %s45 = sphi 0, %s44
      %s61 = sphi 0, %s45
      %s67 = sphi 0, %s69
      %s70 = sphi 0, %s67
      %s71 = sphi 0, %s70
      %s87 = sphi 0, %s71
      %s91 = sphi 0, %s91
      %s93 = sphi 0, %s91
      %s94 = sphi 0, %s93
      %s108 = sphi 0, %s94
      %s112 = sphi 0, %s112
      %s114 = sphi 0, %s112
      %s115 = sphi 0, %s114
      %s129 = sphi 0, %s115
      %s133 = sphi 0, %s133
      %s135 = sphi 0, %s133
      %s136 = sphi 0, %s135
      %s150 = sphi 0, %s136
      %s156 = sphi 0, %s158
      %s159 = sphi 0, %s156
      %s160 = sphi 0, %s159
      %s176 = sphi 0, %s160
      %s182 = sphi 0, %s184
      %s185 = sphi 0, %s182
      %s186 = sphi 0, %s185
      %s202 = sphi 0, %s186
      %s208 = sphi 0, %s210
      %s211 = sphi 0, %s208
      %s212 = sphi 0, %s211
      %s228 = sphi 0, %s212
      %s234 = sphi 0, %s236
      %s237 = sphi 0, %s234
      %s238 = sphi 0, %s237
      %s254 = sphi 0, %s238
      %s260 = sphi 0, %s262
      %s263 = sphi 0, %s260
      %s264 = sphi 0, %s263
      %s280 = sphi 0, %s264
      %s284 = sphi 0, %s284
      %s286 = sphi 0, %s284
      %s287 = sphi 0, %s286
      %s301 = sphi 0, %s287
      %s305 = sphi 0, %s305
      %s307 = sphi 0, %s305
      %s308 = sphi 0, %s307
      %s322 = sphi 0, %s308
      %s328 = sphi 0, %s330
      %s331 = sphi 0, %s328
      %s332 = sphi 0, %s331
      %s348 = sphi 0, %s332
    $region4: #{tst_forward.1} parent=1 // loop_header_branch
      %22 = sbr.rel (%p20) target = $region8
    $region5: #{tst_forward.1} parent=1 // loop_body
      %s24 = ssub.s32 %s19, 1
      %s25 = ssub.s32 %s19, 2
      %s32 = sadd.s32 1, %s27
      %p33 = scmp.ge.s32.totalorder %s32, 2
      %s34 = scalar_select %p33, 0, %s32
      %s35 = sadd.s32 1, %s26
      %s36 = scalar_select %p33, %s35, %s26
      %p37 = scmp.ge.s32.totalorder %s36, 1
      %s38 = scalar_select %p37, 0, %s36
      %s39 = ssub.s32 %s26, %s38
      %p40 = scmp.eq.s32.totalorder %s39, 0
      %s42 = sadd.s32 %s41, 1
      %s43 = scalar_select %p40, %s41, %s42
      %p46 = pneg %p40
      %p47 = scmp.eq.s32.totalorder %s19, 1
      %p48 = por %p46, %p47
      %p49 = scmp.ne.s32.totalorder %s41, %s44
      %p50 = scmp.eq.s32.totalorder %s19, 0
      %p51 = por %p49, %p50
      %p52 = scmp.ne.s32.totalorder %s41, %s44
      %p53 = scmp.eq.s32.totalorder %s24, 1
      %p54 = por %p52, %p53
      %p55 = scmp.ne.s32.totalorder %s44, %s45
      %p56 = scmp.eq.s32.totalorder %s24, 0
      %p57 = por %p55, %p56
      %p58 = scmp.ne.s32.totalorder %s44, %s45
      %p59 = scmp.eq.s32.totalorder %s25, 1
      %p60 = por %p58, %p59
      %p62 = scmp.ne.s32.totalorder %s45, %s61
      %p63 = scmp.eq.s32.totalorder %s25, 0
      %p64 = por %p62, %p63
      %s65 = ssub.s32 %s26, %s38
      %p66 = scmp.eq.s32.totalorder %s65, 0
      %s68 = sadd.s32 %s67, 1
      %s69 = scalar_select %p66, %s67, %s68
      %p72 = pneg %p66
      %p73 = scmp.eq.s32.totalorder %s19, 1
      %p74 = por %p72, %p73
      %p75 = scmp.ne.s32.totalorder %s67, %s70
      %p76 = scmp.eq.s32.totalorder %s19, 0
      %p77 = por %p75, %p76
      %p78 = scmp.ne.s32.totalorder %s67, %s70
      %p79 = scmp.eq.s32.totalorder %s24, 1
      %p80 = por %p78, %p79
      %p81 = scmp.ne.s32.totalorder %s70, %s71
      %p82 = scmp.eq.s32.totalorder %s24, 0
      %p83 = por %p81, %p82
      %p84 = scmp.ne.s32.totalorder %s70, %s71
      %p85 = scmp.eq.s32.totalorder %s25, 1
      %p86 = por %p84, %p85
      %p88 = scmp.ne.s32.totalorder %s71, %s87
      %p89 = scmp.eq.s32.totalorder %s25, 0
      %p90 = por %p88, %p89
      %s92 = sadd.s32 %s91, 1
      %p95 = scmp.eq.s32.totalorder %s19, 1
      %p96 = scmp.ne.s32.totalorder %s91, %s93
      %p97 = scmp.eq.s32.totalorder %s19, 0
      %p98 = por %p96, %p97
      %p99 = scmp.ne.s32.totalorder %s91, %s93
      %p100 = scmp.eq.s32.totalorder %s24, 1
      %p101 = por %p99, %p100
      %p102 = scmp.ne.s32.totalorder %s93, %s94
      %p103 = scmp.eq.s32.totalorder %s24, 0
      %p104 = por %p102, %p103
      %p105 = scmp.ne.s32.totalorder %s93, %s94
      %p106 = scmp.eq.s32.totalorder %s25, 1
      %p107 = por %p105, %p106
      %p109 = scmp.ne.s32.totalorder %s94, %s108
      %p110 = scmp.eq.s32.totalorder %s25, 0
      %p111 = por %p109, %p110
      %s113 = sadd.s32 %s112, 1
      %p116 = scmp.eq.s32.totalorder %s19, 1
      %p117 = scmp.ne.s32.totalorder %s112, %s114
      %p118 = scmp.eq.s32.totalorder %s19, 0
      %p119 = por %p117, %p118
      %p120 = scmp.ne.s32.totalorder %s112, %s114
      %p121 = scmp.eq.s32.totalorder %s24, 1
      %p122 = por %p120, %p121
      %p123 = scmp.ne.s32.totalorder %s114, %s115
      %p124 = scmp.eq.s32.totalorder %s24, 0
      %p125 = por %p123, %p124
      %p126 = scmp.ne.s32.totalorder %s114, %s115
      %p127 = scmp.eq.s32.totalorder %s25, 1
      %p128 = por %p126, %p127
      %p130 = scmp.ne.s32.totalorder %s115, %s129
      %p131 = scmp.eq.s32.totalorder %s25, 0
      %p132 = por %p130, %p131
      %s134 = sadd.s32 %s133, 1
      %p137 = scmp.eq.s32.totalorder %s19, 1
      %p138 = scmp.ne.s32.totalorder %s133, %s135
      %p139 = scmp.eq.s32.totalorder %s19, 0
      %p140 = por %p138, %p139
      %p141 = scmp.ne.s32.totalorder %s133, %s135
      %p142 = scmp.eq.s32.totalorder %s24, 1
      %p143 = por %p141, %p142
      %p144 = scmp.ne.s32.totalorder %s135, %s136
      %p145 = scmp.eq.s32.totalorder %s24, 0
      %p146 = por %p144, %p145
      %p147 = scmp.ne.s32.totalorder %s135, %s136
      %p148 = scmp.eq.s32.totalorder %s25, 1
      %p149 = por %p147, %p148
      %p151 = scmp.ne.s32.totalorder %s136, %s150
      %p152 = scmp.eq.s32.totalorder %s25, 0
      %p153 = por %p151, %p152
      %s154 = ssub.s32 %s27, %s34
      %p155 = scmp.eq.s32.totalorder %s154, 0
      %s157 = sadd.s32 %s156, 1
      %s158 = scalar_select %p155, %s156, %s157
      %p161 = pneg %p155
      %p162 = scmp.eq.s32.totalorder %s19, 1
      %p163 = por %p161, %p162
      %p164 = scmp.ne.s32.totalorder %s156, %s159
      %p165 = scmp.eq.s32.totalorder %s19, 0
      %p166 = por %p164, %p165
      %p167 = scmp.ne.s32.totalorder %s156, %s159
      %p168 = scmp.eq.s32.totalorder %s24, 1
      %p169 = por %p167, %p168
      %p170 = scmp.ne.s32.totalorder %s159, %s160
      %p171 = scmp.eq.s32.totalorder %s24, 0
      %p172 = por %p170, %p171
      %p173 = scmp.ne.s32.totalorder %s159, %s160
      %p174 = scmp.eq.s32.totalorder %s25, 1
      %p175 = por %p173, %p174
      %p177 = scmp.ne.s32.totalorder %s160, %s176
      %p178 = scmp.eq.s32.totalorder %s25, 0
      %p179 = por %p177, %p178
      %s180 = ssub.s32 %s27, %s34
      %p181 = scmp.eq.s32.totalorder %s180, 0
      %s183 = sadd.s32 %s182, 1
      %s184 = scalar_select %p181, %s182, %s183
      %p187 = pneg %p181
      %p188 = scmp.eq.s32.totalorder %s19, 1
      %p189 = por %p187, %p188
      %p190 = scmp.ne.s32.totalorder %s182, %s185
      %p191 = scmp.eq.s32.totalorder %s19, 0
      %p192 = por %p190, %p191
      %p193 = scmp.ne.s32.totalorder %s182, %s185
      %p194 = scmp.eq.s32.totalorder %s24, 1
      %p195 = por %p193, %p194
      %p196 = scmp.ne.s32.totalorder %s185, %s186
      %p197 = scmp.eq.s32.totalorder %s24, 0
      %p198 = por %p196, %p197
      %p199 = scmp.ne.s32.totalorder %s185, %s186
      %p200 = scmp.eq.s32.totalorder %s25, 1
      %p201 = por %p199, %p200
      %p203 = scmp.ne.s32.totalorder %s186, %s202
      %p204 = scmp.eq.s32.totalorder %s25, 0
      %p205 = por %p203, %p204
      %s206 = ssub.s32 %s27, %s34
      %p207 = scmp.eq.s32.totalorder %s206, 0
      %s209 = sadd.s32 %s208, 1
      %s210 = scalar_select %p207, %s208, %s209
      %p213 = pneg %p207
      %p214 = scmp.eq.s32.totalorder %s19, 1
      %p215 = por %p213, %p214
      %p216 = scmp.ne.s32.totalorder %s208, %s211
      %p217 = scmp.eq.s32.totalorder %s19, 0
      %p218 = por %p216, %p217
      %p219 = scmp.ne.s32.totalorder %s208, %s211
      %p220 = scmp.eq.s32.totalorder %s24, 1
      %p221 = por %p219, %p220
      %p222 = scmp.ne.s32.totalorder %s211, %s212
      %p223 = scmp.eq.s32.totalorder %s24, 0
      %p224 = por %p222, %p223
      %p225 = scmp.ne.s32.totalorder %s211, %s212
      %p226 = scmp.eq.s32.totalorder %s25, 1
      %p227 = por %p225, %p226
      %p229 = scmp.ne.s32.totalorder %s212, %s228
      %p230 = scmp.eq.s32.totalorder %s25, 0
      %p231 = por %p229, %p230
      %s232 = ssub.s32 %s27, %s34
      %p233 = scmp.eq.s32.totalorder %s232, 0
      %s235 = sadd.s32 %s234, 1
      %s236 = scalar_select %p233, %s234, %s235
      %p239 = pneg %p233
      %p240 = scmp.eq.s32.totalorder %s19, 1
      %p241 = por %p239, %p240
      %p242 = scmp.ne.s32.totalorder %s234, %s237
      %p243 = scmp.eq.s32.totalorder %s19, 0
      %p244 = por %p242, %p243
      %p245 = scmp.ne.s32.totalorder %s234, %s237
      %p246 = scmp.eq.s32.totalorder %s24, 1
      %p247 = por %p245, %p246
      %p248 = scmp.ne.s32.totalorder %s237, %s238
      %p249 = scmp.eq.s32.totalorder %s24, 0
      %p250 = por %p248, %p249
      %p251 = scmp.ne.s32.totalorder %s237, %s238
      %p252 = scmp.eq.s32.totalorder %s25, 1
      %p253 = por %p251, %p252
      %p255 = scmp.ne.s32.totalorder %s238, %s254
      %p256 = scmp.eq.s32.totalorder %s25, 0
      %p257 = por %p255, %p256
      %s258 = ssub.s32 %s27, %s34
      %p259 = scmp.eq.s32.totalorder %s258, 0
      %s261 = sadd.s32 %s260, 1
      %s262 = scalar_select %p259, %s260, %s261
      %p265 = pneg %p259
      %p266 = scmp.eq.s32.totalorder %s19, 1
      %p267 = por %p265, %p266
      %p268 = scmp.ne.s32.totalorder %s260, %s263
      %p269 = scmp.eq.s32.totalorder %s19, 0
      %p270 = por %p268, %p269
      %p271 = scmp.ne.s32.totalorder %s260, %s263
      %p272 = scmp.eq.s32.totalorder %s24, 1
      %p273 = por %p271, %p272
      %p274 = scmp.ne.s32.totalorder %s263, %s264
      %p275 = scmp.eq.s32.totalorder %s24, 0
      %p276 = por %p274, %p275
      %p277 = scmp.ne.s32.totalorder %s263, %s264
      %p278 = scmp.eq.s32.totalorder %s25, 1
      %p279 = por %p277, %p278
      %p281 = scmp.ne.s32.totalorder %s264, %s280
      %p282 = scmp.eq.s32.totalorder %s25, 0
      %p283 = por %p281, %p282
      %s285 = sadd.s32 %s284, 1
      %p288 = scmp.eq.s32.totalorder %s19, 1
      %p289 = scmp.ne.s32.totalorder %s284, %s286
      %p290 = scmp.eq.s32.totalorder %s19, 0
      %p291 = por %p289, %p290
      %p292 = scmp.ne.s32.totalorder %s284, %s286
      %p293 = scmp.eq.s32.totalorder %s24, 1
      %p294 = por %p292, %p293
      %p295 = scmp.ne.s32.totalorder %s286, %s287
      %p296 = scmp.eq.s32.totalorder %s24, 0
      %p297 = por %p295, %p296
      %p298 = scmp.ne.s32.totalorder %s286, %s287
      %p299 = scmp.eq.s32.totalorder %s25, 1
      %p300 = por %p298, %p299
      %p302 = scmp.ne.s32.totalorder %s287, %s301
      %p303 = scmp.eq.s32.totalorder %s25, 0
      %p304 = por %p302, %p303
      %s306 = sadd.s32 %s305, 1
      %p309 = scmp.eq.s32.totalorder %s19, 1
      %p310 = scmp.ne.s32.totalorder %s305, %s307
      %p311 = scmp.eq.s32.totalorder %s19, 0
      %p312 = por %p310, %p311
      %p313 = scmp.ne.s32.totalorder %s305, %s307
      %p314 = scmp.eq.s32.totalorder %s24, 1
      %p315 = por %p313, %p314
      %p316 = scmp.ne.s32.totalorder %s307, %s308
      %p317 = scmp.eq.s32.totalorder %s24, 0
      %p318 = por %p316, %p317
      %p319 = scmp.ne.s32.totalorder %s307, %s308
      %p320 = scmp.eq.s32.totalorder %s25, 1
      %p321 = por %p319, %p320
      %p323 = scmp.ne.s32.totalorder %s308, %s322
      %p324 = scmp.eq.s32.totalorder %s25, 0
      %p325 = por %p323, %p324
      %s326 = ssub.s32 %s26, %s38
      %p327 = scmp.eq.s32.totalorder %s326, 0
      %s329 = sadd.s32 %s328, 1
      %s330 = scalar_select %p327, %s328, %s329
      %p333 = pneg %p327
      %p334 = scmp.eq.s32.totalorder %s19, 1
      %p335 = por %p333, %p334
      %p336 = scmp.ne.s32.totalorder %s328, %s331
      %p337 = scmp.eq.s32.totalorder %s19, 0
      %p338 = por %p336, %p337
      %p339 = scmp.ne.s32.totalorder %s328, %s331
      %p340 = scmp.eq.s32.totalorder %s24, 1
      %p341 = por %p339, %p340
      %p342 = scmp.ne.s32.totalorder %s331, %s332
      %p343 = scmp.eq.s32.totalorder %s24, 0
      %p344 = por %p342, %p343
      %p345 = scmp.ne.s32.totalorder %s331, %s332
      %p346 = scmp.eq.s32.totalorder %s25, 1
      %p347 = por %p345, %p346
      %p349 = scmp.ne.s32.totalorder %s332, %s348
      %p350 = scmp.eq.s32.totalorder %s25, 0
      %p351 = por %p349, %p350
      %p352 = scmp.le.s32.totalorder 1, %s19
      %p353 = scmp.lt.s32.totalorder %s19, 3
      %p354 = pnand %p352, %p353
      %p355 = pneg %p354
      // Predicated region
      $region9: #{tst_forward.1} parent=5 // pred_check
        _
      $region10: #{tst_forward.1} parent=5 // pred_check_branch
        %357 = sbr.rel (%p354) target = $region12
      $region11: #{tst_forward.1} parent=5 // pred_region
        %s358 = ssub.s32 %s19, 1
        // Predicated region
        $region13: #{tst_forward.1} parent=11 // pred_check
          %p359 = pneg %p57
        $region14: #{tst_forward.1} parent=11 // pred_check_branch
          %361 = sbr.rel (%p359) target = $region16
        $region15: #{tst_forward.1} parent=11 // pred_region
          %s362 = smul.u32 2, %s28
          %p363 = scmp.lt.s32.totalorder %s362, 1
          %s364 = scalar_select %p363, %s362, 1
          %s365 = smul.addr %s364, 8
          %s366 = scalar_lea.vmem %s0, %s365
          %s367 = smul.u32 2, %s28
        $region16: #{tst_forward.1} parent=11 // pred_fallthru
          _
        // Predicated region
        $region17: #{tst_forward.1} parent=11 // pred_check
          %p368 = pneg %p83
        $region18: #{tst_forward.1} parent=11 // pred_check_branch
          %370 = sbr.rel (%p368) target = $region20
        $region19: #{tst_forward.1} parent=11 // pred_region
          %s371 = smul.u32 2, %s28
          %p372 = scmp.lt.s32.totalorder %s371, 1
          %s373 = scalar_select %p372, %s371, 1
          %s374 = smul.addr %s373, 8
          %s375 = scalar_lea.vmem %s1, %s374
          %s376 = smul.u32 2, %s28
        $region20: #{tst_forward.1} parent=11 // pred_fallthru
          _
        // Predicated region
        $region21: #{tst_forward.1} parent=11 // pred_check
          %p377 = pneg %p104
        $region22: #{tst_forward.1} parent=11 // pred_check_branch
          %379 = sbr.rel (%p377) target = $region24
        $region23: #{tst_forward.1} parent=11 // pred_region
          _
        $region24: #{tst_forward.1} parent=11 // pred_fallthru
          _
        // Predicated region
        $region25: #{tst_forward.1} parent=11 // pred_check
          %p380 = pneg %p125
        $region26: #{tst_forward.1} parent=11 // pred_check_branch
          %382 = sbr.rel (%p380) target = $region28
        $region27: #{tst_forward.1} parent=11 // pred_region
          _
        $region28: #{tst_forward.1} parent=11 // pred_fallthru
          _
        // Predicated region
        $region29: #{tst_forward.1} parent=11 // pred_check
          %p383 = pneg %p146
        $region30: #{tst_forward.1} parent=11 // pred_check_branch
          %385 = sbr.rel (%p383) target = $region32
        $region31: #{tst_forward.1} parent=11 // pred_region
          _
        $region32: #{tst_forward.1} parent=11 // pred_fallthru
          _
        // Predicated region
        $region33: #{tst_forward.1} parent=11 // pred_check
          %p386 = pneg %p297
        $region34: #{tst_forward.1} parent=11 // pred_check_branch
          %388 = sbr.rel (%p386) target = $region36
        $region35: #{tst_forward.1} parent=11 // pred_region
          _
        $region36: #{tst_forward.1} parent=11 // pred_fallthru
          _
        // Predicated region
        $region37: #{tst_forward.1} parent=11 // pred_check
          %p389 = pneg %p318
        $region38: #{tst_forward.1} parent=11 // pred_check_branch
          %391 = sbr.rel (%p389) target = $region40
        $region39: #{tst_forward.1} parent=11 // pred_region
          _
        $region40: #{tst_forward.1} parent=11 // pred_fallthru
          _
      $region12: #{tst_forward.1} parent=5 // pred_fallthru
        _
      %p392 = scmp.lt.s32.totalorder %s19, 2
      // Predicated region
      $region41: #{tst_forward.1} parent=5 // pred_check
        %p393 = pneg %p392
      $region42: #{tst_forward.1} parent=5 // pred_check_branch
        %395 = sbr.rel (%p393) target = $region44
      $region43: #{tst_forward.1} parent=5 // pred_region
        // Predicated region
        $region45: #{tst_forward.1} parent=43 // pred_check
          %p396 = pneg %p166
        $region46: #{tst_forward.1} parent=43 // pred_check_branch
          %398 = sbr.rel (%p396) target = $region48
        $region47: #{tst_forward.1} parent=43 // pred_region
          %p399 = scmp.lt.s32.totalorder %s27, 1
          %s400 = scalar_select %p399, %s27, 1
          %s401 = smul.addr %s400, 4
          %s402 = smul.addr %s401, 4
          %s403 = scalar_lea.vmem %s5, %s402
        $region48: #{tst_forward.1} parent=43 // pred_fallthru
          _
        // Predicated region
        $region49: #{tst_forward.1} parent=43 // pred_check
          %p404 = pneg %p192
        $region50: #{tst_forward.1} parent=43 // pred_check_branch
          %406 = sbr.rel (%p404) target = $region52
        $region51: #{tst_forward.1} parent=43 // pred_region
          %p407 = scmp.lt.s32.totalorder %s27, 1
          %s408 = scalar_select %p407, %s27, 1
          %s409 = smul.addr %s408, 4
          %s410 = smul.addr %s409, 4
          %s411 = scalar_lea.vmem %s6, %s410
        $region52: #{tst_forward.1} parent=43 // pred_fallthru
          _
        // Predicated region
        $region53: #{tst_forward.1} parent=43 // pred_check
          %p412 = pneg %p218
        $region54: #{tst_forward.1} parent=43 // pred_check_branch
          %414 = sbr.rel (%p412) target = $region56
        $region55: #{tst_forward.1} parent=43 // pred_region
          %p415 = scmp.lt.s32.totalorder %s27, 1
          %s416 = scalar_select %p415, %s27, 1
          %s417 = smul.addr %s416, 4
          %s418 = smul.addr %s417, 4
          %s419 = scalar_lea.vmem %s7, %s418
        $region56: #{tst_forward.1} parent=43 // pred_fallthru
          _
        // Predicated region
        $region57: #{tst_forward.1} parent=43 // pred_check
          %p420 = pneg %p244
        $region58: #{tst_forward.1} parent=43 // pred_check_branch
          %422 = sbr.rel (%p420) target = $region60
        $region59: #{tst_forward.1} parent=43 // pred_region
          %p423 = scmp.lt.s32.totalorder %s27, 1
          %s424 = scalar_select %p423, %s27, 1
          %s425 = smul.addr %s424, 8
          %s426 = smul.addr %s425, 4
          %s427 = scalar_lea.vmem %s8, %s426
        $region60: #{tst_forward.1} parent=43 // pred_fallthru
          _
        // Predicated region
        $region61: #{tst_forward.1} parent=43 // pred_check
          %p428 = pneg %p270
        $region62: #{tst_forward.1} parent=43 // pred_check_branch
          %430 = sbr.rel (%p428) target = $region64
        $region63: #{tst_forward.1} parent=43 // pred_region
          %p431 = scmp.lt.s32.totalorder %s27, 1
          %s432 = scalar_select %p431, %s27, 1
          %s433 = smul.addr %s432, 8
          %s434 = scalar_lea.vmem %s9, %s433
        $region64: #{tst_forward.1} parent=43 // pred_fallthru
          _
      $region44: #{tst_forward.1} parent=5 // pred_fallthru
        _
      %p435 = scmp.le.s32.totalorder 1, %s19
      %p436 = scmp.lt.s32.totalorder %s19, 3
      %p437 = pnand %p435, %p436
      %p438 = pneg %p437
      // Predicated region
      $region65: #{tst_forward.1} parent=5 // pred_check
        _
      $region66: #{tst_forward.1} parent=5 // pred_check_branch
        %440 = sbr.rel (%p437) target = $region68
      $region67: #{tst_forward.1} parent=5 // pred_region
        %s441 = ssub.s32 %s19, 1
        %s442 = smul.u32 2, %s28
        %p443 = scmp.lt.s32.totalorder %s442, 1
        %s444 = scalar_select %p443, %s442, 1
        %s445 = smul.addr %s444, 8
        %s446 = scalar_lea.vmem %s0, %s445
        %p447 = pneg %p57
        %p448 = pneg %p54
        %s449 = smul.u32 2, %s28
        %p450 = scmp.lt.s32.totalorder %s449, 1
        %s451 = scalar_select %p450, %s449, 1
        %s452 = smul.addr %s451, 8
        %s453 = scalar_lea.vmem %s1, %s452
        %p454 = pneg %p83
        %p455 = pneg %p80
        %p456 = pneg %p104
        %p457 = pneg %p101
        %p458 = pneg %p125
        %p459 = pneg %p122
        %p460 = pneg %p146
        %p461 = pneg %p143
        %p462 = scmp.lt.s32.totalorder %s29, 1
        %s463 = scalar_select %p462, %s29, 1
        %s464 = smul.addr %s463, 4
        %s465 = smul.addr %s464, 4
        %s466 = scalar_lea.vmem %s5, %s465
        %p467 = pneg %p172
        %p468 = pneg %p169
        %p469 = scmp.lt.s32.totalorder %s29, 1
        %s470 = scalar_select %p469, %s29, 1
        %s471 = smul.addr %s470, 4
        %s472 = smul.addr %s471, 4
        %s473 = scalar_lea.vmem %s6, %s472
        %p474 = pneg %p198
        %p475 = pneg %p195
        %p476 = scmp.lt.s32.totalorder %s29, 1
        %s477 = scalar_select %p476, %s29, 1
        %s478 = smul.addr %s477, 4
        %s479 = smul.addr %s478, 4
        %s480 = scalar_lea.vmem %s7, %s479
        %p481 = pneg %p224
        %p482 = pneg %p221
        %p483 = scmp.lt.s32.totalorder %s29, 1
        %s484 = scalar_select %p483, %s29, 1
        %s485 = smul.addr %s484, 8
        %s486 = smul.addr %s485, 4
        %s487 = scalar_lea.vmem %s8, %s486
        %p488 = pneg %p250
        %p489 = pneg %p247
        %p490 = scmp.lt.s32.totalorder %s29, 1
        %s491 = scalar_select %p490, %s29, 1
        %s492 = smul.addr %s491, 8
        %s493 = scalar_lea.vmem %s9, %s492
        %p494 = pneg %p276
        %p495 = pneg %p273
        %p496 = pneg %p297
        %p497 = pneg %p294
        %p498 = pneg %p318
        %p499 = pneg %p315
        %p500 = pneg %p344
        %p501 = pneg %p341
        %s502 = smul.u32 2, %s28
        %p503 = scmp.lt.s32.totalorder %s502, 1
        %s504 = scalar_select %p503, %s502, 1
        %s505 = smul.addr %s504, 8
        %s506 = scalar_lea.vmem %s0, %s505
        %s507 = smul.u32 2, %s28
        %s508 = smul.u32 2, %s28
        %p509 = scmp.lt.s32.totalorder %s508, 1
        %s510 = scalar_select %p509, %s508, 1
        %s511 = smul.addr %s510, 8
        %s512 = scalar_lea.vmem %s1, %s511
        %s513 = smul.u32 2, %s28
        %p514 = scmp.lt.s32.totalorder %s29, 1
        %s515 = scalar_select %p514, %s29, 1
        %s516 = smul.addr %s515, 4
        %s517 = smul.addr %s516, 4
        %s518 = scalar_lea.vmem %s5, %s517
        %p519 = scmp.lt.s32.totalorder %s29, 1
        %s520 = scalar_select %p519, %s29, 1
        %s521 = smul.addr %s520, 4
        %s522 = smul.addr %s521, 4
        %s523 = scalar_lea.vmem %s6, %s522
        %p524 = scmp.lt.s32.totalorder %s29, 1
        %s525 = scalar_select %p524, %s29, 1
        %s526 = smul.addr %s525, 4
        %s527 = smul.addr %s526, 4
        %s528 = scalar_lea.vmem %s7, %s527
        %p529 = scmp.lt.s32.totalorder %s29, 1
        %s530 = scalar_select %p529, %s29, 1
        %s531 = smul.addr %s530, 8
        %s532 = smul.addr %s531, 4
        %s533 = scalar_lea.vmem %s8, %s532
        %p534 = scmp.lt.s32.totalorder %s29, 1
        %s535 = scalar_select %p534, %s29, 1
        %s536 = smul.addr %s535, 8
        %s537 = scalar_lea.vmem %s9, %s536
        %s538 = smul.u32 2, %s28
        %p540 = scmp.eq.s32.totalorder %s29, 0
        // Predicated region
        $region69: #{tst_forward.1} parent=67 // pred_check
          %p541 = pneg %p540
        $region70: #{tst_forward.1} parent=67 // pred_check_branch
          %543 = sbr.rel (%p541) target = $region72
        $region71: #{tst_forward.1} parent=67 // pred_region
          %v544 = vld [vmem:[%s506] sm:$0xff]
          %v545 = vld [vmem:[%s506 + $0x8] sm:$0xff]
          %v546 = vpack.c.bf16 %v545, %v544
          %v547 = vld [vmem:[%s3] sm:$0x3]
          %v548 = vld [vmem:[%s4] sm:$0x1]
          %v550 = vlaneseq
          %v551 = vshrl.u32 %v550, 7
          %v552 = vsub.s32 0, %v551
          %v553 = vrot.slane %v548, %v552
          %vm555 = vcmask 31744
          %v557 = vsel %vm555, %v546, 0
          %vm559 = vcmask 1041408
          %v561 = vsel %vm559, %v547, 0
          %563 = vmatprep.subr.bf16.mxu0 0
          %564 = vmatpush1.bf16.msra.mxu0 %v561
          %565 = vmatprep.subr.bf16.mxu0 0
          %566 = vmatpush1.bf16.msra.mxu0 0
          %567 = vmatprep.subr.bf16.mxu0 0
          %568 = vmatpush1.bf16.msra.mxu0 0
          %569 = vmatprep.subr.bf16.mxu0 0
          %570 = vmatpush1.bf16.msra.mxu0 0
          %571 = vmatprep.subr.bf16.mxu0 0
          %572 = vmatpush1.bf16.msra.mxu0 0
          %573 = vmatprep.subr.bf16.mxu0 0
          %574 = vmatpush1.bf16.msra.mxu0 0
          %575 = vmatprep.subr.bf16.mxu0 0
          %576 = vmatpush1.bf16.msra.mxu0 0
          %577 = vmatprep.subr.bf16.mxu0 0
          %578 = vmatpush1.bf16.msra.mxu0 0
          %579 = vmatprep.subr.bf16.mxu0 0
          %580 = vmatpush1.bf16.msra.mxu0 0
          %581 = vmatprep.subr.bf16.mxu0 0
          %582 = vmatpush1.bf16.msra.mxu0 0
          %583 = vmatprep.subr.bf16.mxu0 0
          %584 = vmatpush1.bf16.msra.mxu0 0
          %585 = vmatprep.subr.bf16.mxu0 0
          %586 = vmatpush1.bf16.msra.mxu0 0
          %587 = vmatprep.subr.bf16.mxu0 0
          %588 = vmatpush1.bf16.msra.mxu0 0
          %589 = vmatprep.subr.bf16.mxu0 0
          %590 = vmatpush1.bf16.msra.mxu0 0
          %591 = vmatprep.subr.bf16.mxu0 0
          %592 = vmatpush1.bf16.msra.mxu0 0
          %593 = vmatprep.subr.bf16.mxu0 0
          %594 = vmatpush1.bf16.msra.mxu0 0
          %595 = vmatprep.mubr.bf16.mxu0 0
          %596 = vmatmul.mubr.bf16.gmra.mrb[0].mxu0 %v557
          %v597 = vpop.f32.mrb[0].mxu0
          %v598 = vadd.f32 %v553, %v597
          %v599 = vpop.f32.mrb[0].mxu0
          %v600 = vpop.f32.mrb[0].mxu0
          %v601 = vadd.f32 %v553, %v600
          %v602 = vpop.f32.mrb[0].mxu0
          %603 = vdwg.mxu0
          %v604 = vld [vmem:[%s512] sm:$0xff]
          %v605 = vld [vmem:[%s512 + $0x8] sm:$0xff]
          %v606 = vadd.f32 %v598, %v604
          %v607 = vadd.f32 %v601, %v605
          %vm608 = vcmask 261120
          %609 = vst.msk [vmem:[#allocation2] sm:$0xff] %vm608, %v606
          %610 = vst.msk [vmem:[#allocation2 + $0x8] sm:$0xff] %vm608, %v607
        $region72: #{tst_forward.1} parent=67 // pred_fallthru
          _
        %v611 = vld [vmem:[#allocation2] sm:$0xff]
        %v612 = vld [vmem:[#allocation2 + $0x8] sm:$0xff]
        %v613 = vld [vmem:[%s537] sm:$0xff]
        %v614 = vpack.c.bf16 %v612, %v611
        %v615 = vld [vmem:[%s518] sm:$0xf]
        %v616 = vld [vmem:[%s518 + $0x4] sm:$0xf]
        %v617 = vld [vmem:[%s518 + $0x8] sm:$0xf]
        %v618 = vld [vmem:[%s518 + $0xc] sm:$0xf]
        %v619 = vlaneseq
        %v620 = vshrl.u32 %v619, 7
        %v621 = vsub.s32 0, %v620
        %v622 = vrot.slane %v613, %v621
        %v627 = vunpack.c.l.b16 %v615
        %v628 = vunpack.c.l.b16 %v616
        %v629 = vunpack.c.l.b16 %v617
        %v630 = vunpack.c.l.b16 %v618
        %v631 = vpack.c.b16 %v628, %v627
        %v632 = vpack.c.b16 %v630, %v629
        %vm635 = vcmask 261120
        %v637 = vsel %vm635, %v614, 0
        %639 = vmatprep.subr.bf16.mxu0 0
        %640 = vmatpush1.bf16.msra.mxu0 %v631
        %641 = vmatprep.subr.bf16.mxu0 0
        %642 = vmatpush1.bf16.msra.mxu0 %v632
        %643 = vmatprep.subr.bf16.mxu0 0
        %644 = vmatpush1.bf16.msra.mxu0 0
        %645 = vmatprep.subr.bf16.mxu0 0
        %646 = vmatpush1.bf16.msra.mxu0 0
        %647 = vmatprep.subr.bf16.mxu0 0
        %648 = vmatpush1.bf16.msra.mxu0 0
        %649 = vmatprep.subr.bf16.mxu0 0
        %650 = vmatpush1.bf16.msra.mxu0 0
        %651 = vmatprep.subr.bf16.mxu0 0
        %652 = vmatpush1.bf16.msra.mxu0 0
        %653 = vmatprep.subr.bf16.mxu0 0
        %654 = vmatpush1.bf16.msra.mxu0 0
        %655 = vmatprep.subr.bf16.mxu0 0
        %656 = vmatpush1.bf16.msra.mxu0 0
        %657 = vmatprep.subr.bf16.mxu0 0
        %658 = vmatpush1.bf16.msra.mxu0 0
        %659 = vmatprep.subr.bf16.mxu0 0
        %660 = vmatpush1.bf16.msra.mxu0 0
        %661 = vmatprep.subr.bf16.mxu0 0
        %662 = vmatpush1.bf16.msra.mxu0 0
        %663 = vmatprep.subr.bf16.mxu0 0
        %664 = vmatpush1.bf16.msra.mxu0 0
        %665 = vmatprep.subr.bf16.mxu0 0
        %666 = vmatpush1.bf16.msra.mxu0 0
        %667 = vmatprep.subr.bf16.mxu0 0
        %668 = vmatpush1.bf16.msra.mxu0 0
        %669 = vmatprep.subr.bf16.mxu0 0
        %670 = vmatpush1.bf16.msra.mxu0 0
        %671 = vmatprep.mubr.bf16.mxu0 0
        %672 = vmatmul.mubr.bf16.gmra.mrb[0].mxu0 %v637
        %v673 = vpop.f32.mrb[0].mxu0
        %v674 = vadd.f32 %v622, %v673
        %v675 = vpop.f32.mrb[0].mxu0
        %v676 = vpop.f32.mrb[0].mxu0
        %v677 = vadd.f32 %v622, %v676
        %v678 = vpop.f32.mrb[0].mxu0
        %679 = vdwg.mxu0
        %v680 = vpack.c.bf16 %v677, %v674
        %v681 = vld [vmem:[%s2] sm:$0xff]
        %683 = vrot.lane.b32.xlu0 %v680, 96
        %v684 = vpop.permute.xlu0 %683
        %vm685 = vcmask 64512
        %v687 = vsel %vm685, %v680, 0
        %v690 = vsel %vm685, %v684, 0
        %692 = vmatprep.subr.bf16.mxu0 0
        %693 = vmatpush1.bf16.xpose.msra.mxu0 %v690
        %694 = vmatprep.subr.bf16.mxu0 0
        %695 = vmatpush1.bf16.xpose.msra.mxu0 0
        %696 = vmatprep.subr.bf16.mxu0 0
        %697 = vmatpush1.bf16.xpose.msra.mxu0 0
        %698 = vmatprep.subr.bf16.mxu0 0
        %699 = vmatpush1.bf16.xpose.msra.mxu0 0
        %700 = vmatprep.subr.bf16.mxu0 0
        %701 = vmatpush1.bf16.xpose.msra.mxu0 0
        %702 = vmatprep.subr.bf16.mxu0 0
        %703 = vmatpush1.bf16.xpose.msra.mxu0 0
        %704 = vmatprep.subr.bf16.mxu0 0
        %705 = vmatpush1.bf16.xpose.msra.mxu0 0
        %706 = vmatprep.subr.bf16.mxu0 0
        %707 = vmatpush1.bf16.xpose.msra.mxu0 0
        %708 = vmatprep.subr.bf16.mxu0 0
        %709 = vmatpush1.bf16.xpose.msra.mxu0 0
        %710 = vmatprep.subr.bf16.mxu0 0
        %711 = vmatpush1.bf16.xpose.msra.mxu0 0
        %712 = vmatprep.subr.bf16.mxu0 0
        %713 = vmatpush1.bf16.xpose.msra.mxu0 0
        %714 = vmatprep.subr.bf16.mxu0 0
        %715 = vmatpush1.bf16.xpose.msra.mxu0 0
        %716 = vmatprep.subr.bf16.mxu0 0
        %717 = vmatpush1.bf16.xpose.msra.mxu0 0
        %718 = vmatprep.subr.bf16.mxu0 0
        %719 = vmatpush1.bf16.xpose.msra.mxu0 0
        %720 = vmatprep.subr.bf16.mxu0 0
        %721 = vmatpush1.bf16.xpose.msra.mxu0 0
        %722 = vmatprep.subr.bf16.mxu0 0
        %723 = vmatpush1.bf16.xpose.msra.mxu0 0
        %724 = vmatprep.mubr.bf16.mxu0 0
        %725 = vmatmul.mubr.bf16.gmra.mrb[0].mxu0 %v687
        %v726 = vpop.f32.mrb[0].mxu0
        %v727 = vadd.f32 %v681, %v726
        %v728 = vpop.f32.mrb[0].mxu0
        %v729 = vpop.f32.mrb[0].mxu0
        %v730 = vpop.f32.mrb[0].mxu0
        %731 = vdwg.mxu0
        %v732 = vsel %vm685, %v727, -inf
        %733 = vmax.xlane.f32.xlu0 %v732
        %v734 = vpop.xlane.xlu0 %733
        %v735 = vsub.f32 %v727, %v734
        %v736 = vmul.f32 %v735, 1.442695
        %v737 = vpow.pop %v736
        %v738 = vsel %vm685, %v737, 0.0
        %739 = vadd.xlane.f32.xlu0 %v738
        %v740 = vpop.xlane.xlu0 %739
        %v741 = vrcp.pop %v740
        %v742 = vpack.c.bf16 %v737, %v737
        %743 = vrot.lane.b32.xlu0 %v680, 64
        %v744 = vpop.permute.xlu0 %743
        %v746 = vsel %vm685, %v742, 0
        %vm748 = vcmask 1043456
        %v750 = vsel %vm748, %v744, 0
        %752 = vmatprep.subr.bf16.mxu0 0
        %753 = vmatpush1.bf16.msra.mxu0 %v750
        %754 = vmatprep.subr.bf16.mxu0 0
        %755 = vmatpush1.bf16.msra.mxu0 0
        %756 = vmatprep.subr.bf16.mxu0 0
        %757 = vmatpush1.bf16.msra.mxu0 0
        %758 = vmatprep.subr.bf16.mxu0 0
        %759 = vmatpush1.bf16.msra.mxu0 0
        %760 = vmatprep.subr.bf16.mxu0 0
        %761 = vmatpush1.bf16.msra.mxu0 0
        %762 = vmatprep.subr.bf16.mxu0 0
        %763 = vmatpush1.bf16.msra.mxu0 0
        %764 = vmatprep.subr.bf16.mxu0 0
        %765 = vmatpush1.bf16.msra.mxu0 0
        %766 = vmatprep.subr.bf16.mxu0 0
        %767 = vmatpush1.bf16.msra.mxu0 0
        %768 = vmatprep.subr.bf16.mxu0 0
        %769 = vmatpush1.bf16.msra.mxu0 0
        %770 = vmatprep.subr.bf16.mxu0 0
        %771 = vmatpush1.bf16.msra.mxu0 0
        %772 = vmatprep.subr.bf16.mxu0 0
        %773 = vmatpush1.bf16.msra.mxu0 0
        %774 = vmatprep.subr.bf16.mxu0 0
        %775 = vmatpush1.bf16.msra.mxu0 0
        %776 = vmatprep.subr.bf16.mxu0 0
        %777 = vmatpush1.bf16.msra.mxu0 0
        %778 = vmatprep.subr.bf16.mxu0 0
        %779 = vmatpush1.bf16.msra.mxu0 0
        %780 = vmatprep.subr.bf16.mxu0 0
        %781 = vmatpush1.bf16.msra.mxu0 0
        %782 = vmatprep.subr.bf16.mxu0 0
        %783 = vmatpush1.bf16.msra.mxu0 0
        %784 = vmatprep.mubr.bf16.mxu0 0
        %785 = vmatmul.mubr.bf16.gmra.mrb[0].mxu0 %v746
        %v786 = vpop.f32.mrb[0].mxu0
        %v787 = vadd.f32 0.0, %v786
        %v788 = vpop.f32.mrb[0].mxu0
        %v789 = vpop.f32.mrb[0].mxu0
        %v790 = vpop.f32.mrb[0].mxu0
        %791 = vdwg.mxu0
        %v792 = vmul.f32 %v787, %v741
        %v793 = vpack.c.bf16 %v792, %v792
        %vm794 = vcmask 60416
        %795 = vst.msk [vmem:[#allocation3] sm:$0xf] %vm794, %v793
        %796 = vrot.lane.b32.xlu0 %v680, 120
        %v797 = vpop.permute.xlu0 %796
        %798 = vrot.lane.b32.xlu0 %v680, 88
        %v799 = vpop.permute.xlu0 %798
        %v801 = vsel %vm685, %v797, 0
        %v804 = vsel %vm685, %v799, 0
        %806 = vmatprep.subr.bf16.mxu0 0
        %807 = vmatpush1.bf16.xpose.msra.mxu0 %v804
        %808 = vmatprep.subr.bf16.mxu0 0
        %809 = vmatpush1.bf16.xpose.msra.mxu0 0
        %810 = vmatprep.subr.bf16.mxu0 0
        %811 = vmatpush1.bf16.xpose.msra.mxu0 0
        %812 = vmatprep.subr.bf16.mxu0 0
        %813 = vmatpush1.bf16.xpose.msra.mxu0 0
        %814 = vmatprep.subr.bf16.mxu0 0
        %815 = vmatpush1.bf16.xpose.msra.mxu0 0
        %816 = vmatprep.subr.bf16.mxu0 0
        %817 = vmatpush1.bf16.xpose.msra.mxu0 0
        %818 = vmatprep.subr.bf16.mxu0 0
        %819 = vmatpush1.bf16.xpose.msra.mxu0 0
        %820 = vmatprep.subr.bf16.mxu0 0
        %821 = vmatpush1.bf16.xpose.msra.mxu0 0
        %822 = vmatprep.subr.bf16.mxu0 0
        %823 = vmatpush1.bf16.xpose.msra.mxu0 0
        %824 = vmatprep.subr.bf16.mxu0 0
        %825 = vmatpush1.bf16.xpose.msra.mxu0 0
        %826 = vmatprep.subr.bf16.mxu0 0
        %827 = vmatpush1.bf16.xpose.msra.mxu0 0
        %828 = vmatprep.subr.bf16.mxu0 0
        %829 = vmatpush1.bf16.xpose.msra.mxu0 0
        %830 = vmatprep.subr.bf16.mxu0 0
        %831 = vmatpush1.bf16.xpose.msra.mxu0 0
        %832 = vmatprep.subr.bf16.mxu0 0
        %833 = vmatpush1.bf16.xpose.msra.mxu0 0
        %834 = vmatprep.subr.bf16.mxu0 0
        %835 = vmatpush1.bf16.xpose.msra.mxu0 0
        %836 = vmatprep.subr.bf16.mxu0 0
        %837 = vmatpush1.bf16.xpose.msra.mxu0 0
        %838 = vmatprep.mubr.bf16.mxu0 0
        %839 = vmatmul.mubr.bf16.gmra.mrb[0].mxu0 %v801
        %v840 = vpop.f32.mrb[0].mxu0
        %v841 = vadd.f32 %v681, %v840
        %v842 = vpop.f32.mrb[0].mxu0
        %v843 = vpop.f32.mrb[0].mxu0
        %v844 = vpop.f32.mrb[0].mxu0
        %845 = vdwg.mxu0
        %v846 = vsel %vm685, %v841, -inf
        %847 = vmax.xlane.f32.xlu0 %v846
        %v848 = vpop.xlane.xlu0 %847
        %v849 = vsub.f32 %v841, %v848
        %v850 = vmul.f32 %v849, 1.442695
        %v851 = vpow.pop %v850
        %v852 = vsel %vm685, %v851, 0.0
        %853 = vadd.xlane.f32.xlu0 %v852
        %v854 = vpop.xlane.xlu0 %853
        %v855 = vrcp.pop %v854
        %v856 = vpack.c.bf16 %v851, %v851
        %857 = vrot.lane.b32.xlu0 %v680, 56
        %v858 = vpop.permute.xlu0 %857
        %v860 = vsel %vm685, %v856, 0
        %v863 = vsel %vm748, %v858, 0
        %865 = vmatprep.subr.bf16.mxu0 0
        %866 = vmatpush1.bf16.msra.mxu0 %v863
        %867 = vmatprep.subr.bf16.mxu0 0
        %868 = vmatpush1.bf16.msra.mxu0 0
        %869 = vmatprep.subr.bf16.mxu0 0
        %870 = vmatpush1.bf16.msra.mxu0 0
        %871 = vmatprep.subr.bf16.mxu0 0
        %872 = vmatpush1.bf16.msra.mxu0 0
        %873 = vmatprep.subr.bf16.mxu0 0
        %874 = vmatpush1.bf16.msra.mxu0 0
        %875 = vmatprep.subr.bf16.mxu0 0
        %876 = vmatpush1.bf16.msra.mxu0 0
        %877 = vmatprep.subr.bf16.mxu0 0
        %878 = vmatpush1.bf16.msra.mxu0 0
        %879 = vmatprep.subr.bf16.mxu0 0
        %880 = vmatpush1.bf16.msra.mxu0 0
        %881 = vmatprep.subr.bf16.mxu0 0
        %882 = vmatpush1.bf16.msra.mxu0 0
        %883 = vmatprep.subr.bf16.mxu0 0
        %884 = vmatpush1.bf16.msra.mxu0 0
        %885 = vmatprep.subr.bf16.mxu0 0
        %886 = vmatpush1.bf16.msra.mxu0 0
        %887 = vmatprep.subr.bf16.mxu0 0
        %888 = vmatpush1.bf16.msra.mxu0 0
        %889 = vmatprep.subr.bf16.mxu0 0
        %890 = vmatpush1.bf16.msra.mxu0 0
        %891 = vmatprep.subr.bf16.mxu0 0
        %892 = vmatpush1.bf16.msra.mxu0 0
        %893 = vmatprep.subr.bf16.mxu0 0
        %894 = vmatpush1.bf16.msra.mxu0 0
        %895 = vmatprep.subr.bf16.mxu0 0
        %896 = vmatpush1.bf16.msra.mxu0 0
        %897 = vmatprep.mubr.bf16.mxu0 0
        %898 = vmatmul.mubr.bf16.gmra.mrb[0].mxu0 %v860
        %v899 = vpop.f32.mrb[0].mxu0
        %v900 = vadd.f32 0.0, %v899
        %v901 = vpop.f32.mrb[0].mxu0
        %v902 = vpop.f32.mrb[0].mxu0
        %v903 = vpop.f32.mrb[0].mxu0
        %904 = vdwg.mxu0
        %v905 = vmul.f32 %v900, %v855
        %v906 = vpack.c.bf16 %v905, %v905
        %908 = vrot.lane.b32.xlu0 %v906, 8
        %v909 = vpop.permute.xlu0 %908
        %vm911 = vcmask 126016
        %912 = vst.msk [vmem:[#allocation3] sm:$0xf] %vm911, %v909
        %913 = vrot.lane.b32.xlu0 %v680, 112
        %v914 = vpop.permute.xlu0 %913
        %915 = vrot.lane.b32.xlu0 %v680, 80
        %v916 = vpop.permute.xlu0 %915
        %v918 = vsel %vm685, %v914, 0
        %v921 = vsel %vm685, %v916, 0
        %923 = vmatprep.subr.bf16.mxu0 0
        %924 = vmatpush1.bf16.xpose.msra.mxu0 %v921
        %925 = vmatprep.subr.bf16.mxu0 0
        %926 = vmatpush1.bf16.xpose.msra.mxu0 0
        %927 = vmatprep.subr.bf16.mxu0 0
        %928 = vmatpush1.bf16.xpose.msra.mxu0 0
        %929 = vmatprep.subr.bf16.mxu0 0
        %930 = vmatpush1.bf16.xpose.msra.mxu0 0
        %931 = vmatprep.subr.bf16.mxu0 0
        %932 = vmatpush1.bf16.xpose.msra.mxu0 0
        %933 = vmatprep.subr.bf16.mxu0 0
        %934 = vmatpush1.bf16.xpose.msra.mxu0 0
        %935 = vmatprep.subr.bf16.mxu0 0
        %936 = vmatpush1.bf16.xpose.msra.mxu0 0
        %937 = vmatprep.subr.bf16.mxu0 0
        %938 = vmatpush1.bf16.xpose.msra.mxu0 0
        %939 = vmatprep.subr.bf16.mxu0 0
        %940 = vmatpush1.bf16.xpose.msra.mxu0 0
        %941 = vmatprep.subr.bf16.mxu0 0
        %942 = vmatpush1.bf16.xpose.msra.mxu0 0
        %943 = vmatprep.subr.bf16.mxu0 0
        %944 = vmatpush1.bf16.xpose.msra.mxu0 0
        %945 = vmatprep.subr.bf16.mxu0 0
        %946 = vmatpush1.bf16.xpose.msra.mxu0 0
        %947 = vmatprep.subr.bf16.mxu0 0
        %948 = vmatpush1.bf16.xpose.msra.mxu0 0
        %949 = vmatprep.subr.bf16.mxu0 0
        %950 = vmatpush1.bf16.xpose.msra.mxu0 0
        %951 = vmatprep.subr.bf16.mxu0 0
        %952 = vmatpush1.bf16.xpose.msra.mxu0 0
        %953 = vmatprep.subr.bf16.mxu0 0
        %954 = vmatpush1.bf16.xpose.msra.mxu0 0
        %955 = vmatprep.mubr.bf16.mxu0 0
        %956 = vmatmul.mubr.bf16.gmra.mrb[0].mxu0 %v918
        %v957 = vpop.f32.mrb[0].mxu0
        %v958 = vadd.f32 %v681, %v957
        %v959 = vpop.f32.mrb[0].mxu0
        %v960 = vpop.f32.mrb[0].mxu0
        %v961 = vpop.f32.mrb[0].mxu0
        %962 = vdwg.mxu0
        %v963 = vsel %vm685, %v958, -inf
        %964 = vmax.xlane.f32.xlu0 %v963
        %v965 = vpop.xlane.xlu0 %964
        %v966 = vsub.f32 %v958, %v965
        %v967 = vmul.f32 %v966, 1.442695
        %v968 = vpow.pop %v967
        %v969 = vsel %vm685, %v968, 0.0
        %970 = vadd.xlane.f32.xlu0 %v969
        %v971 = vpop.xlane.xlu0 %970
        %v972 = vrcp.pop %v971
        %v973 = vpack.c.bf16 %v968, %v968
        %974 = vrot.lane.b32.xlu0 %v680, 48
        %v975 = vpop.permute.xlu0 %974
        %v977 = vsel %vm685, %v973, 0
        %v980 = vsel %vm748, %v975, 0
        %982 = vmatprep.subr.bf16.mxu0 0
        %983 = vmatpush1.bf16.msra.mxu0 %v980
        %984 = vmatprep.subr.bf16.mxu0 0
        %985 = vmatpush1.bf16.msra.mxu0 0
        %986 = vmatprep.subr.bf16.mxu0 0
        %987 = vmatpush1.bf16.msra.mxu0 0
        %988 = vmatprep.subr.bf16.mxu0 0
        %989 = vmatpush1.bf16.msra.mxu0 0
        %990 = vmatprep.subr.bf16.mxu0 0
        %991 = vmatpush1.bf16.msra.mxu0 0
        %992 = vmatprep.subr.bf16.mxu0 0
        %993 = vmatpush1.bf16.msra.mxu0 0
        %994 = vmatprep.subr.bf16.mxu0 0
        %995 = vmatpush1.bf16.msra.mxu0 0
        %996 = vmatprep.subr.bf16.mxu0 0
        %997 = vmatpush1.bf16.msra.mxu0 0
        %998 = vmatprep.subr.bf16.mxu0 0
        %999 = vmatpush1.bf16.msra.mxu0 0
        %1000 = vmatprep.subr.bf16.mxu0 0
        %1001 = vmatpush1.bf16.msra.mxu0 0
        %1002 = vmatprep.subr.bf16.mxu0 0
        %1003 = vmatpush1.bf16.msra.mxu0 0
        %1004 = vmatprep.subr.bf16.mxu0 0
        %1005 = vmatpush1.bf16.msra.mxu0 0
        %1006 = vmatprep.subr.bf16.mxu0 0
        %1007 = vmatpush1.bf16.msra.mxu0 0
        %1008 = vmatprep.subr.bf16.mxu0 0
        %1009 = vmatpush1.bf16.msra.mxu0 0
        %1010 = vmatprep.subr.bf16.mxu0 0
        %1011 = vmatpush1.bf16.msra.mxu0 0
        %1012 = vmatprep.subr.bf16.mxu0 0
        %1013 = vmatpush1.bf16.msra.mxu0 0
        %1014 = vmatprep.mubr.bf16.mxu0 0
        %1015 = vmatmul.mubr.bf16.gmra.mrb[0].mxu0 %v977
        %v1016 = vpop.f32.mrb[0].mxu0
        %v1017 = vadd.f32 0.0, %v1016
        %v1018 = vpop.f32.mrb[0].mxu0
        %v1019 = vpop.f32.mrb[0].mxu0
        %v1020 = vpop.f32.mrb[0].mxu0
        %1021 = vdwg.mxu0
        %v1022 = vmul.f32 %v1017, %v972
        %v1023 = vpack.c.bf16 %v1022, %v1022
        %1025 = vrot.lane.b32.xlu0 %v1023, 16
        %v1026 = vpop.permute.xlu0 %1025
        %vm1028 = vcmask 191616
        %1029 = vst.msk [vmem:[#allocation3] sm:$0xf] %vm1028, %v1026
        %1030 = vrot.lane.b32.xlu0 %v680, 104
        %v1031 = vpop.permute.xlu0 %1030
        %1032 = vrot.lane.b32.xlu0 %v680, 72
        %v1033 = vpop.permute.xlu0 %1032
        %v1035 = vsel %vm685, %v1031, 0
        %v1038 = vsel %vm685, %v1033, 0
        %1040 = vmatprep.subr.bf16.mxu0 0
        %1041 = vmatpush1.bf16.xpose.msra.mxu0 %v1038
        %1042 = vmatprep.subr.bf16.mxu0 0
        %1043 = vmatpush1.bf16.xpose.msra.mxu0 0
        %1044 = vmatprep.subr.bf16.mxu0 0
        %1045 = vmatpush1.bf16.xpose.msra.mxu0 0
        %1046 = vmatprep.subr.bf16.mxu0 0
        %1047 = vmatpush1.bf16.xpose.msra.mxu0 0
        %1048 = vmatprep.subr.bf16.mxu0 0
        %1049 = vmatpush1.bf16.xpose.msra.mxu0 0
        %1050 = vmatprep.subr.bf16.mxu0 0
        %1051 = vmatpush1.bf16.xpose.msra.mxu0 0
        %1052 = vmatprep.subr.bf16.mxu0 0
        %1053 = vmatpush1.bf16.xpose.msra.mxu0 0
        %1054 = vmatprep.subr.bf16.mxu0 0
        %1055 = vmatpush1.bf16.xpose.msra.mxu0 0
        %1056 = vmatprep.subr.bf16.mxu0 0
        %1057 = vmatpush1.bf16.xpose.msra.mxu0 0
        %1058 = vmatprep.subr.bf16.mxu0 0
        %1059 = vmatpush1.bf16.xpose.msra.mxu0 0
        %1060 = vmatprep.subr.bf16.mxu0 0
        %1061 = vmatpush1.bf16.xpose.msra.mxu0 0
        %1062 = vmatprep.subr.bf16.mxu0 0
        %1063 = vmatpush1.bf16.xpose.msra.mxu0 0
        %1064 = vmatprep.subr.bf16.mxu0 0
        %1065 = vmatpush1.bf16.xpose.msra.mxu0 0
        %1066 = vmatprep.subr.bf16.mxu0 0
        %1067 = vmatpush1.bf16.xpose.msra.mxu0 0
        %1068 = vmatprep.subr.bf16.mxu0 0
        %1069 = vmatpush1.bf16.xpose.msra.mxu0 0
        %1070 = vmatprep.subr.bf16.mxu0 0
        %1071 = vmatpush1.bf16.xpose.msra.mxu0 0
        %1072 = vmatprep.mubr.bf16.mxu0 0
        %1073 = vmatmul.mubr.bf16.gmra.mrb[0].mxu0 %v1035
        %v1074 = vpop.f32.mrb[0].mxu0
        %v1075 = vadd.f32 %v681, %v1074
        %v1076 = vpop.f32.mrb[0].mxu0
        %v1077 = vpop.f32.mrb[0].mxu0
        %v1078 = vpop.f32.mrb[0].mxu0
        %1079 = vdwg.mxu0
        %v1080 = vsel %vm685, %v1075, -inf
        %1081 = vmax.xlane.f32.xlu0 %v1080
        %v1082 = vpop.xlane.xlu0 %1081
        %v1083 = vsub.f32 %v1075, %v1082
        %v1084 = vmul.f32 %v1083, 1.442695
        %v1085 = vpow.pop %v1084
        %v1086 = vsel %vm685, %v1085, 0.0
        %1087 = vadd.xlane.f32.xlu0 %v1086
        %v1088 = vpop.xlane.xlu0 %1087
        %v1089 = vrcp.pop %v1088
        %v1090 = vpack.c.bf16 %v1085, %v1085
        %1091 = vrot.lane.b32.xlu0 %v680, 40
        %v1092 = vpop.permute.xlu0 %1091
        %v1094 = vsel %vm685, %v1090, 0
        %v1097 = vsel %vm748, %v1092, 0
        %1099 = vmatprep.subr.bf16.mxu0 0
        %1100 = vmatpush1.bf16.msra.mxu0 %v1097
        %1101 = vmatprep.subr.bf16.mxu0 0
        %1102 = vmatpush1.bf16.msra.mxu0 0
        %1103 = vmatprep.subr.bf16.mxu0 0
        %1104 = vmatpush1.bf16.msra.mxu0 0
        %1105 = vmatprep.subr.bf16.mxu0 0
        %1106 = vmatpush1.bf16.msra.mxu0 0
        %1107 = vmatprep.subr.bf16.mxu0 0
        %1108 = vmatpush1.bf16.msra.mxu0 0
        %1109 = vmatprep.subr.bf16.mxu0 0
        %1110 = vmatpush1.bf16.msra.mxu0 0
        %1111 = vmatprep.subr.bf16.mxu0 0
        %1112 = vmatpush1.bf16.msra.mxu0 0
        %1113 = vmatprep.subr.bf16.mxu0 0
        %1114 = vmatpush1.bf16.msra.mxu0 0
        %1115 = vmatprep.subr.bf16.mxu0 0
        %1116 = vmatpush1.bf16.msra.mxu0 0
        %1117 = vmatprep.subr.bf16.mxu0 0
        %1118 = vmatpush1.bf16.msra.mxu0 0
        %1119 = vmatprep.subr.bf16.mxu0 0
        %1120 = vmatpush1.bf16.msra.mxu0 0
        %1121 = vmatprep.subr.bf16.mxu0 0
        %1122 = vmatpush1.bf16.msra.mxu0 0
        %1123 = vmatprep.subr.bf16.mxu0 0
        %1124 = vmatpush1.bf16.msra.mxu0 0
        %1125 = vmatprep.subr.bf16.mxu0 0
        %1126 = vmatpush1.bf16.msra.mxu0 0
        %1127 = vmatprep.subr.bf16.mxu0 0
        %1128 = vmatpush1.bf16.msra.mxu0 0
        %1129 = vmatprep.subr.bf16.mxu0 0
        %1130 = vmatpush1.bf16.msra.mxu0 0
        %1131 = vmatprep.mubr.bf16.mxu0 0
        %1132 = vmatmul.mubr.bf16.gmra.mrb[0].mxu0 %v1094
        %v1133 = vpop.f32.mrb[0].mxu0
        %v1134 = vadd.f32 0.0, %v1133
        %v1135 = vpop.f32.mrb[0].mxu0
        %v1136 = vpop.f32.mrb[0].mxu0
        %v1137 = vpop.f32.mrb[0].mxu0
        %1138 = vdwg.mxu0
        %v1139 = vmul.f32 %v1134, %v1089
        %v1140 = vpack.c.bf16 %v1139, %v1139
        %1142 = vrot.lane.b32.xlu0 %v1140, 24
        %v1143 = vpop.permute.xlu0 %1142
        %vm1145 = vcmask 257216
        %1146 = vst.msk [vmem:[#allocation3] sm:$0xf] %vm1145, %v1143
        %v1147 = vrot.slane %v680, 4
        %1148 = vrot.lane.b32.xlu0 %v1147, 96
        %v1149 = vpop.permute.xlu0 %1148
        %v1151 = vsel %vm685, %v1147, 0
        %v1154 = vsel %vm685, %v1149, 0
        %1156 = vmatprep.subr.bf16.mxu0 0
        %1157 = vmatpush1.bf16.xpose.msra.mxu0 %v1154
        %1158 = vmatprep.subr.bf16.mxu0 0
        %1159 = vmatpush1.bf16.xpose.msra.mxu0 0
        %1160 = vmatprep.subr.bf16.mxu0 0
        %1161 = vmatpush1.bf16.xpose.msra.mxu0 0
        %1162 = vmatprep.subr.bf16.mxu0 0
        %1163 = vmatpush1.bf16.xpose.msra.mxu0 0
        %1164 = vmatprep.subr.bf16.mxu0 0
        %1165 = vmatpush1.bf16.xpose.msra.mxu0 0
        %1166 = vmatprep.subr.bf16.mxu0 0
        %1167 = vmatpush1.bf16.xpose.msra.mxu0 0
        %1168 = vmatprep.subr.bf16.mxu0 0
        %1169 = vmatpush1.bf16.xpose.msra.mxu0 0
        %1170 = vmatprep.subr.bf16.mxu0 0
        %1171 = vmatpush1.bf16.xpose.msra.mxu0 0
        %1172 = vmatprep.subr.bf16.mxu0 0
        %1173 = vmatpush1.bf16.xpose.msra.mxu0 0
        %1174 = vmatprep.subr.bf16.mxu0 0
        %1175 = vmatpush1.bf16.xpose.msra.mxu0 0
        %1176 = vmatprep.subr.bf16.mxu0 0
        %1177 = vmatpush1.bf16.xpose.msra.mxu0 0
        %1178 = vmatprep.subr.bf16.mxu0 0
        %1179 = vmatpush1.bf16.xpose.msra.mxu0 0
        %1180 = vmatprep.subr.bf16.mxu0 0
        %1181 = vmatpush1.bf16.xpose.msra.mxu0 0
        %1182 = vmatprep.subr.bf16.mxu0 0
        %1183 = vmatpush1.bf16.xpose.msra.mxu0 0
        %1184 = vmatprep.subr.bf16.mxu0 0
        %1185 = vmatpush1.bf16.xpose.msra.mxu0 0
        %1186 = vmatprep.subr.bf16.mxu0 0
        %1187 = vmatpush1.bf16.xpose.msra.mxu0 0
        %1188 = vmatprep.mubr.bf16.mxu0 0
        %1189 = vmatmul.mubr.bf16.gmra.mrb[0].mxu0 %v1151
        %v1190 = vpop.f32.mrb[0].mxu0
        %v1191 = vadd.f32 %v681, %v1190
        %v1192 = vpop.f32.mrb[0].mxu0
        %v1193 = vpop.f32.mrb[0].mxu0
        %v1194 = vpop.f32.mrb[0].mxu0
        %1195 = vdwg.mxu0
        %v1196 = vsel %vm685, %v1191, -inf
        %1197 = vmax.xlane.f32.xlu0 %v1196
        %v1198 = vpop.xlane.xlu0 %1197
        %v1199 = vsub.f32 %v1191, %v1198
        %v1200 = vmul.f32 %v1199, 1.442695
        %v1201 = vpow.pop %v1200
        %v1202 = vsel %vm685, %v1201, 0.0
        %1203 = vadd.xlane.f32.xlu0 %v1202
        %v1204 = vpop.xlane.xlu0 %1203
        %v1205 = vrcp.pop %v1204
        %v1206 = vpack.c.bf16 %v1201, %v1201
        %1207 = vrot.lane.b32.xlu0 %v1147, 64
        %v1208 = vpop.permute.xlu0 %1207
        %v1210 = vsel %vm685, %v1206, 0
        %v1213 = vsel %vm748, %v1208, 0
        %1215 = vmatprep.subr.bf16.mxu0 0
        %1216 = vmatpush1.bf16.msra.mxu0 %v1213
        %1217 = vmatprep.subr.bf16.mxu0 0
        %1218 = vmatpush1.bf16.msra.mxu0 0
        %1219 = vmatprep.subr.bf16.mxu0 0
        %1220 = vmatpush1.bf16.msra.mxu0 0
        %1221 = vmatprep.subr.bf16.mxu0 0
        %1222 = vmatpush1.bf16.msra.mxu0 0
        %1223 = vmatprep.subr.bf16.mxu0 0
        %1224 = vmatpush1.bf16.msra.mxu0 0
        %1225 = vmatprep.subr.bf16.mxu0 0
        %1226 = vmatpush1.bf16.msra.mxu0 0
        %1227 = vmatprep.subr.bf16.mxu0 0
        %1228 = vmatpush1.bf16.msra.mxu0 0
        %1229 = vmatprep.subr.bf16.mxu0 0
        %1230 = vmatpush1.bf16.msra.mxu0 0
        %1231 = vmatprep.subr.bf16.mxu0 0
        %1232 = vmatpush1.bf16.msra.mxu0 0
        %1233 = vmatprep.subr.bf16.mxu0 0
        %1234 = vmatpush1.bf16.msra.mxu0 0
        %1235 = vmatprep.subr.bf16.mxu0 0
        %1236 = vmatpush1.bf16.msra.mxu0 0
        %1237 = vmatprep.subr.bf16.mxu0 0
        %1238 = vmatpush1.bf16.msra.mxu0 0
        %1239 = vmatprep.subr.bf16.mxu0 0
        %1240 = vmatpush1.bf16.msra.mxu0 0
        %1241 = vmatprep.subr.bf16.mxu0 0
        %1242 = vmatpush1.bf16.msra.mxu0 0
        %1243 = vmatprep.subr.bf16.mxu0 0
        %1244 = vmatpush1.bf16.msra.mxu0 0
        %1245 = vmatprep.subr.bf16.mxu0 0
        %1246 = vmatpush1.bf16.msra.mxu0 0
        %1247 = vmatprep.mubr.bf16.mxu0 0
        %1248 = vmatmul.mubr.bf16.gmra.mrb[0].mxu0 %v1210
        %v1249 = vpop.f32.mrb[0].mxu0
        %v1250 = vadd.f32 0.0, %v1249
        %v1251 = vpop.f32.mrb[0].mxu0
        %v1252 = vpop.f32.mrb[0].mxu0
        %v1253 = vpop.f32.mrb[0].mxu0
        %1254 = vdwg.mxu0
        %v1255 = vmul.f32 %v1250, %v1205
        %v1256 = vpack.c.bf16 %v1255, %v1255
        %v1258 = vrot.slane %v1256, 4
        %vm1260 = vcmask 64516
        %1261 = vst.msk [vmem:[#allocation3] sm:$0xf0] %vm1260, %v1258
        %1262 = vrot.lane.b32.xlu0 %v1147, 120
        %v1263 = vpop.permute.xlu0 %1262
        %1264 = vrot.lane.b32.xlu0 %v1147, 88
        %v1265 = vpop.permute.xlu0 %1264
        %v1267 = vsel %vm685, %v1263, 0
        %v1270 = vsel %vm685, %v1265, 0
        %1272 = vmatprep.subr.bf16.mxu0 0
        %1273 = vmatpush1.bf16.xpose.msra.mxu0 %v1270
        %1274 = vmatprep.subr.bf16.mxu0 0
        %1275 = vmatpush1.bf16.xpose.msra.mxu0 0
        %1276 = vmatprep.subr.bf16.mxu0 0
        %1277 = vmatpush1.bf16.xpose.msra.mxu0 0
        %1278 = vmatprep.subr.bf16.mxu0 0
        %1279 = vmatpush1.bf16.xpose.msra.mxu0 0
        %1280 = vmatprep.subr.bf16.mxu0 0
        %1281 = vmatpush1.bf16.xpose.msra.mxu0 0
        %1282 = vmatprep.subr.bf16.mxu0 0
        %1283 = vmatpush1.bf16.xpose.msra.mxu0 0
        %1284 = vmatprep.subr.bf16.mxu0 0
        %1285 = vmatpush1.bf16.xpose.msra.mxu0 0
        %1286 = vmatprep.subr.bf16.mxu0 0
        %1287 = vmatpush1.bf16.xpose.msra.mxu0 0
        %1288 = vmatprep.subr.bf16.mxu0 0
        %1289 = vmatpush1.bf16.xpose.msra.mxu0 0
        %1290 = vmatprep.subr.bf16.mxu0 0
        %1291 = vmatpush1.bf16.xpose.msra.mxu0 0
        %1292 = vmatprep.subr.bf16.mxu0 0
        %1293 = vmatpush1.bf16.xpose.msra.mxu0 0
        %1294 = vmatprep.subr.bf16.mxu0 0
        %1295 = vmatpush1.bf16.xpose.msra.mxu0 0
        %1296 = vmatprep.subr.bf16.mxu0 0
        %1297 = vmatpush1.bf16.xpose.msra.mxu0 0
        %1298 = vmatprep.subr.bf16.mxu0 0
        %1299 = vmatpush1.bf16.xpose.msra.mxu0 0
        %1300 = vmatprep.subr.bf16.mxu0 0
        %1301 = vmatpush1.bf16.xpose.msra.mxu0 0
        %1302 = vmatprep.subr.bf16.mxu0 0
        %1303 = vmatpush1.bf16.xpose.msra.mxu0 0
        %1304 = vmatprep.mubr.bf16.mxu0 0
        %1305 = vmatmul.mubr.bf16.gmra.mrb[0].mxu0 %v1267
        %v1306 = vpop.f32.mrb[0].mxu0
        %v1307 = vadd.f32 %v681, %v1306
        %v1308 = vpop.f32.mrb[0].mxu0
        %v1309 = vpop.f32.mrb[0].mxu0
        %v1310 = vpop.f32.mrb[0].mxu0
        %1311 = vdwg.mxu0
        %v1312 = vsel %vm685, %v1307, -inf
        %1313 = vmax.xlane.f32.xlu0 %v1312
        %v1314 = vpop.xlane.xlu0 %1313
        %v1315 = vsub.f32 %v1307, %v1314
        %v1316 = vmul.f32 %v1315, 1.442695
        %v1317 = vpow.pop %v1316
        %v1318 = vsel %vm685, %v1317, 0.0
        %1319 = vadd.xlane.f32.xlu0 %v1318
        %v1320 = vpop.xlane.xlu0 %1319
        %v1321 = vrcp.pop %v1320
        %v1322 = vpack.c.bf16 %v1317, %v1317
        %1323 = vrot.lane.b32.xlu0 %v1147, 56
        %v1324 = vpop.permute.xlu0 %1323
        %v1326 = vsel %vm685, %v1322, 0
        %v1329 = vsel %vm748, %v1324, 0
        %1331 = vmatprep.subr.bf16.mxu0 0
        %1332 = vmatpush1.bf16.msra.mxu0 %v1329
        %1333 = vmatprep.subr.bf16.mxu0 0
        %1334 = vmatpush1.bf16.msra.mxu0 0
        %1335 = vmatprep.subr.bf16.mxu0 0
        %1336 = vmatpush1.bf16.msra.mxu0 0
        %1337 = vmatprep.subr.bf16.mxu0 0
        %1338 = vmatpush1.bf16.msra.mxu0 0
        %1339 = vmatprep.subr.bf16.mxu0 0
        %1340 = vmatpush1.bf16.msra.mxu0 0
        %1341 = vmatprep.subr.bf16.mxu0 0
        %1342 = vmatpush1.bf16.msra.mxu0 0
        %1343 = vmatprep.subr.bf16.mxu0 0
        %1344 = vmatpush1.bf16.msra.mxu0 0
        %1345 = vmatprep.subr.bf16.mxu0 0
        %1346 = vmatpush1.bf16.msra.mxu0 0
        %1347 = vmatprep.subr.bf16.mxu0 0
        %1348 = vmatpush1.bf16.msra.mxu0 0
        %1349 = vmatprep.subr.bf16.mxu0 0
        %1350 = vmatpush1.bf16.msra.mxu0 0
        %1351 = vmatprep.subr.bf16.mxu0 0
        %1352 = vmatpush1.bf16.msra.mxu0 0
        %1353 = vmatprep.subr.bf16.mxu0 0
        %1354 = vmatpush1.bf16.msra.mxu0 0
        %1355 = vmatprep.subr.bf16.mxu0 0
        %1356 = vmatpush1.bf16.msra.mxu0 0
        %1357 = vmatprep.subr.bf16.mxu0 0
        %1358 = vmatpush1.bf16.msra.mxu0 0
        %1359 = vmatprep.subr.bf16.mxu0 0
        %1360 = vmatpush1.bf16.msra.mxu0 0
        %1361 = vmatprep.subr.bf16.mxu0 0
        %1362 = vmatpush1.bf16.msra.mxu0 0
        %1363 = vmatprep.mubr.bf16.mxu0 0
        %1364 = vmatmul.mubr.bf16.gmra.mrb[0].mxu0 %v1326
        %v1365 = vpop.f32.mrb[0].mxu0
        %v1366 = vadd.f32 0.0, %v1365
        %v1367 = vpop.f32.mrb[0].mxu0
        %v1368 = vpop.f32.mrb[0].mxu0
        %v1369 = vpop.f32.mrb[0].mxu0
        %1370 = vdwg.mxu0
        %v1371 = vmul.f32 %v1366, %v1321
        %v1372 = vpack.c.bf16 %v1371, %v1371
        %v1374 = vrot.slane %v1372, 4
        %1375 = vrot.lane.b32.xlu0 %v1374, 8
        %v1376 = vpop.permute.xlu0 %1375
        %vm1378 = vcmask 130116
        %1379 = vst.msk [vmem:[#allocation3] sm:$0xf0] %vm1378, %v1376
        %1380 = vrot.lane.b32.xlu0 %v1147, 112
        %v1381 = vpop.permute.xlu0 %1380
        %1382 = vrot.lane.b32.xlu0 %v1147, 80
        %v1383 = vpop.permute.xlu0 %1382
        %v1385 = vsel %vm685, %v1381, 0
        %v1388 = vsel %vm685, %v1383, 0
        %1390 = vmatprep.subr.bf16.mxu0 0
        %1391 = vmatpush1.bf16.xpose.msra.mxu0 %v1388
        %1392 = vmatprep.subr.bf16.mxu0 0
        %1393 = vmatpush1.bf16.xpose.msra.mxu0 0
        %1394 = vmatprep.subr.bf16.mxu0 0
        %1395 = vmatpush1.bf16.xpose.msra.mxu0 0
        %1396 = vmatprep.subr.bf16.mxu0 0
        %1397 = vmatpush1.bf16.xpose.msra.mxu0 0
        %1398 = vmatprep.subr.bf16.mxu0 0
        %1399 = vmatpush1.bf16.xpose.msra.mxu0 0
        %1400 = vmatprep.subr.bf16.mxu0 0
        %1401 = vmatpush1.bf16.xpose.msra.mxu0 0
        %1402 = vmatprep.subr.bf16.mxu0 0
        %1403 = vmatpush1.bf16.xpose.msra.mxu0 0
        %1404 = vmatprep.subr.bf16.mxu0 0
        %1405 = vmatpush1.bf16.xpose.msra.mxu0 0
        %1406 = vmatprep.subr.bf16.mxu0 0
        %1407 = vmatpush1.bf16.xpose.msra.mxu0 0
        %1408 = vmatprep.subr.bf16.mxu0 0
        %1409 = vmatpush1.bf16.xpose.msra.mxu0 0
        %1410 = vmatprep.subr.bf16.mxu0 0
        %1411 = vmatpush1.bf16.xpose.msra.mxu0 0
        %1412 = vmatprep.subr.bf16.mxu0 0
        %1413 = vmatpush1.bf16.xpose.msra.mxu0 0
        %1414 = vmatprep.subr.bf16.mxu0 0
        %1415 = vmatpush1.bf16.xpose.msra.mxu0 0
        %1416 = vmatprep.subr.bf16.mxu0 0
        %1417 = vmatpush1.bf16.xpose.msra.mxu0 0
        %1418 = vmatprep.subr.bf16.mxu0 0
        %1419 = vmatpush1.bf16.xpose.msra.mxu0 0
        %1420 = vmatprep.subr.bf16.mxu0 0
        %1421 = vmatpush1.bf16.xpose.msra.mxu0 0
        %1422 = vmatprep.mubr.bf16.mxu0 0
        %1423 = vmatmul.mubr.bf16.gmra.mrb[0].mxu0 %v1385
        %v1424 = vpop.f32.mrb[0].mxu0
        %v1425 = vadd.f32 %v681, %v1424
        %v1426 = vpop.f32.mrb[0].mxu0
        %v1427 = vpop.f32.mrb[0].mxu0
        %v1428 = vpop.f32.mrb[0].mxu0
        %1429 = vdwg.mxu0
        %v1430 = vsel %vm685, %v1425, -inf
        %1431 = vmax.xlane.f32.xlu0 %v1430
        %v1432 = vpop.xlane.xlu0 %1431
        %v1433 = vsub.f32 %v1425, %v1432
        %v1434 = vmul.f32 %v1433, 1.442695
        %v1435 = vpow.pop %v1434
        %v1436 = vsel %vm685, %v1435, 0.0
        %1437 = vadd.xlane.f32.xlu0 %v1436
        %v1438 = vpop.xlane.xlu0 %1437
        %v1439 = vrcp.pop %v1438
        %v1440 = vpack.c.bf16 %v1435, %v1435
        %1441 = vrot.lane.b32.xlu0 %v1147, 48
        %v1442 = vpop.permute.xlu0 %1441
        %v1444 = vsel %vm685, %v1440, 0
        %v1447 = vsel %vm748, %v1442, 0
        %1449 = vmatprep.subr.bf16.mxu0 0
        %1450 = vmatpush1.bf16.msra.mxu0 %v1447
        %1451 = vmatprep.subr.bf16.mxu0 0
        %1452 = vmatpush1.bf16.msra.mxu0 0
        %1453 = vmatprep.subr.bf16.mxu0 0
        %1454 = vmatpush1.bf16.msra.mxu0 0
        %1455 = vmatprep.subr.bf16.mxu0 0
        %1456 = vmatpush1.bf16.msra.mxu0 0
        %1457 = vmatprep.subr.bf16.mxu0 0
        %1458 = vmatpush1.bf16.msra.mxu0 0
        %1459 = vmatprep.subr.bf16.mxu0 0
        %1460 = vmatpush1.bf16.msra.mxu0 0
        %1461 = vmatprep.subr.bf16.mxu0 0
        %1462 = vmatpush1.bf16.msra.mxu0 0
        %1463 = vmatprep.subr.bf16.mxu0 0
        %1464 = vmatpush1.bf16.msra.mxu0 0
        %1465 = vmatprep.subr.bf16.mxu0 0
        %1466 = vmatpush1.bf16.msra.mxu0 0
        %1467 = vmatprep.subr.bf16.mxu0 0
        %1468 = vmatpush1.bf16.msra.mxu0 0
        %1469 = vmatprep.subr.bf16.mxu0 0
        %1470 = vmatpush1.bf16.msra.mxu0 0
        %1471 = vmatprep.subr.bf16.mxu0 0
        %1472 = vmatpush1.bf16.msra.mxu0 0
        %1473 = vmatprep.subr.bf16.mxu0 0
        %1474 = vmatpush1.bf16.msra.mxu0 0
        %1475 = vmatprep.subr.bf16.mxu0 0
        %1476 = vmatpush1.bf16.msra.mxu0 0
        %1477 = vmatprep.subr.bf16.mxu0 0
        %1478 = vmatpush1.bf16.msra.mxu0 0
        %1479 = vmatprep.subr.bf16.mxu0 0
        %1480 = vmatpush1.bf16.msra.mxu0 0
        %1481 = vmatprep.mubr.bf16.mxu0 0
        %1482 = vmatmul.mubr.bf16.gmra.mrb[0].mxu0 %v1444
        %v1483 = vpop.f32.mrb[0].mxu0
        %v1484 = vadd.f32 0.0, %v1483
        %v1485 = vpop.f32.mrb[0].mxu0
        %v1486 = vpop.f32.mrb[0].mxu0
        %v1487 = vpop.f32.mrb[0].mxu0
        %1488 = vdwg.mxu0
        %v1489 = vmul.f32 %v1484, %v1439
        %v1490 = vpack.c.bf16 %v1489, %v1489
        %v1492 = vrot.slane %v1490, 4
        %1493 = vrot.lane.b32.xlu0 %v1492, 16
        %v1494 = vpop.permute.xlu0 %1493
        %vm1496 = vcmask 195716
        %1497 = vst.msk [vmem:[#allocation3] sm:$0xf0] %vm1496, %v1494
        %1498 = vrot.lane.b32.xlu0 %v1147, 104
        %v1499 = vpop.permute.xlu0 %1498
        %1500 = vrot.lane.b32.xlu0 %v1147, 72
        %v1501 = vpop.permute.xlu0 %1500
        %v1503 = vsel %vm685, %v1499, 0
        %v1506 = vsel %vm685, %v1501, 0
        %1508 = vmatprep.subr.bf16.mxu0 0
        %1509 = vmatpush1.bf16.xpose.msra.mxu0 %v1506
        %1510 = vmatprep.subr.bf16.mxu0 0
        %1511 = vmatpush1.bf16.xpose.msra.mxu0 0
        %1512 = vmatprep.subr.bf16.mxu0 0
        %1513 = vmatpush1.bf16.xpose.msra.mxu0 0
        %1514 = vmatprep.subr.bf16.mxu0 0
        %1515 = vmatpush1.bf16.xpose.msra.mxu0 0
        %1516 = vmatprep.subr.bf16.mxu0 0
        %1517 = vmatpush1.bf16.xpose.msra.mxu0 0
        %1518 = vmatprep.subr.bf16.mxu0 0
        %1519 = vmatpush1.bf16.xpose.msra.mxu0 0
        %1520 = vmatprep.subr.bf16.mxu0 0
        %1521 = vmatpush1.bf16.xpose.msra.mxu0 0
        %1522 = vmatprep.subr.bf16.mxu0 0
        %1523 = vmatpush1.bf16.xpose.msra.mxu0 0
        %1524 = vmatprep.subr.bf16.mxu0 0
        %1525 = vmatpush1.bf16.xpose.msra.mxu0 0
        %1526 = vmatprep.subr.bf16.mxu0 0
        %1527 = vmatpush1.bf16.xpose.msra.mxu0 0
        %1528 = vmatprep.subr.bf16.mxu0 0
        %1529 = vmatpush1.bf16.xpose.msra.mxu0 0
        %1530 = vmatprep.subr.bf16.mxu0 0
        %1531 = vmatpush1.bf16.xpose.msra.mxu0 0
        %1532 = vmatprep.subr.bf16.mxu0 0
        %1533 = vmatpush1.bf16.xpose.msra.mxu0 0
        %1534 = vmatprep.subr.bf16.mxu0 0
        %1535 = vmatpush1.bf16.xpose.msra.mxu0 0
        %1536 = vmatprep.subr.bf16.mxu0 0
        %1537 = vmatpush1.bf16.xpose.msra.mxu0 0
        %1538 = vmatprep.subr.bf16.mxu0 0
        %1539 = vmatpush1.bf16.xpose.msra.mxu0 0
        %1540 = vmatprep.mubr.bf16.mxu0 0
        %1541 = vmatmul.mubr.bf16.gmra.mrb[0].mxu0 %v1503
        %v1542 = vpop.f32.mrb[0].mxu0
        %v1543 = vadd.f32 %v681, %v1542
        %v1544 = vpop.f32.mrb[0].mxu0
        %v1545 = vpop.f32.mrb[0].mxu0
        %v1546 = vpop.f32.mrb[0].mxu0
        %1547 = vdwg.mxu0
        %v1548 = vsel %vm685, %v1543, -inf
        %1549 = vmax.xlane.f32.xlu0 %v1548
        %v1550 = vpop.xlane.xlu0 %1549
        %v1551 = vsub.f32 %v1543, %v1550
        %v1552 = vmul.f32 %v1551, 1.442695
        %v1553 = vpow.pop %v1552
        %v1554 = vsel %vm685, %v1553, 0.0
        %1555 = vadd.xlane.f32.xlu0 %v1554
        %v1556 = vpop.xlane.xlu0 %1555
        %v1557 = vrcp.pop %v1556
        %v1558 = vpack.c.bf16 %v1553, %v1553
        %1559 = vrot.lane.b32.xlu0 %v1147, 40
        %v1560 = vpop.permute.xlu0 %1559
        %v1562 = vsel %vm685, %v1558, 0
        %v1565 = vsel %vm748, %v1560, 0
        %1567 = vmatprep.subr.bf16.mxu0 0
        %1568 = vmatpush1.bf16.msra.mxu0 %v1565
        %1569 = vmatprep.subr.bf16.mxu0 0
        %1570 = vmatpush1.bf16.msra.mxu0 0
        %1571 = vmatprep.subr.bf16.mxu0 0
        %1572 = vmatpush1.bf16.msra.mxu0 0
        %1573 = vmatprep.subr.bf16.mxu0 0
        %1574 = vmatpush1.bf16.msra.mxu0 0
        %1575 = vmatprep.subr.bf16.mxu0 0
        %1576 = vmatpush1.bf16.msra.mxu0 0
        %1577 = vmatprep.subr.bf16.mxu0 0
        %1578 = vmatpush1.bf16.msra.mxu0 0
        %1579 = vmatprep.subr.bf16.mxu0 0
        %1580 = vmatpush1.bf16.msra.mxu0 0
        %1581 = vmatprep.subr.bf16.mxu0 0
        %1582 = vmatpush1.bf16.msra.mxu0 0
        %1583 = vmatprep.subr.bf16.mxu0 0
        %1584 = vmatpush1.bf16.msra.mxu0 0
        %1585 = vmatprep.subr.bf16.mxu0 0
        %1586 = vmatpush1.bf16.msra.mxu0 0
        %1587 = vmatprep.subr.bf16.mxu0 0
        %1588 = vmatpush1.bf16.msra.mxu0 0
        %1589 = vmatprep.subr.bf16.mxu0 0
        %1590 = vmatpush1.bf16.msra.mxu0 0
        %1591 = vmatprep.subr.bf16.mxu0 0
        %1592 = vmatpush1.bf16.msra.mxu0 0
        %1593 = vmatprep.subr.bf16.mxu0 0
        %1594 = vmatpush1.bf16.msra.mxu0 0
        %1595 = vmatprep.subr.bf16.mxu0 0
        %1596 = vmatpush1.bf16.msra.mxu0 0
        %1597 = vmatprep.subr.bf16.mxu0 0
        %1598 = vmatpush1.bf16.msra.mxu0 0
        %1599 = vmatprep.mubr.bf16.mxu0 0
        %1600 = vmatmul.mubr.bf16.gmra.mrb[0].mxu0 %v1562
        %v1601 = vpop.f32.mrb[0].mxu0
        %v1602 = vadd.f32 0.0, %v1601
        %v1603 = vpop.f32.mrb[0].mxu0
        %v1604 = vpop.f32.mrb[0].mxu0
        %v1605 = vpop.f32.mrb[0].mxu0
        %1606 = vdwg.mxu0
        %v1607 = vmul.f32 %v1602, %v1557
        %v1608 = vpack.c.bf16 %v1607, %v1607
        %v1610 = vrot.slane %v1608, 4
        %1611 = vrot.lane.b32.xlu0 %v1610, 24
        %v1612 = vpop.permute.xlu0 %1611
        %vm1614 = vcmask 261316
        %1615 = vst.msk [vmem:[#allocation3] sm:$0xf0] %vm1614, %v1612
        %v1616 = vld [vmem:[#allocation3] sm:$0xff]
        %v1617 = vld [vmem:[%s523] sm:$0xf]
        %v1618 = vld [vmem:[%s523 + $0x4] sm:$0xf]
        %v1619 = vld [vmem:[%s523 + $0x8] sm:$0xf]
        %v1620 = vld [vmem:[%s523 + $0xc] sm:$0xf]
        %v1621 = vlaneseq
        %v1622 = vshrl.u32 %v1621, 7
        %v1623 = vsub.s32 1, %v1622
        %v1624 = vrot.slane %v613, %v1623
        %v1629 = vunpack.c.l.b16 %v1617
        %v1630 = vunpack.c.l.b16 %v1618
        %v1631 = vunpack.c.l.b16 %v1619
        %v1632 = vunpack.c.l.b16 %v1620
        %v1633 = vpack.c.b16 %v1630, %v1629
        %v1634 = vpack.c.b16 %v1632, %v1631
        %v1638 = vsel %vm635, %v1616, 0
        %1640 = vmatprep.subr.bf16.mxu0 0
        %1641 = vmatpush1.bf16.msra.mxu0 %v1633
        %1642 = vmatprep.subr.bf16.mxu0 0
        %1643 = vmatpush1.bf16.msra.mxu0 %v1634
        %1644 = vmatprep.subr.bf16.mxu0 0
        %1645 = vmatpush1.bf16.msra.mxu0 0
        %1646 = vmatprep.subr.bf16.mxu0 0
        %1647 = vmatpush1.bf16.msra.mxu0 0
        %1648 = vmatprep.subr.bf16.mxu0 0
        %1649 = vmatpush1.bf16.msra.mxu0 0
        %1650 = vmatprep.subr.bf16.mxu0 0
        %1651 = vmatpush1.bf16.msra.mxu0 0
        %1652 = vmatprep.subr.bf16.mxu0 0
        %1653 = vmatpush1.bf16.msra.mxu0 0
        %1654 = vmatprep.subr.bf16.mxu0 0
        %1655 = vmatpush1.bf16.msra.mxu0 0
        %1656 = vmatprep.subr.bf16.mxu0 0
        %1657 = vmatpush1.bf16.msra.mxu0 0
        %1658 = vmatprep.subr.bf16.mxu0 0
        %1659 = vmatpush1.bf16.msra.mxu0 0
        %1660 = vmatprep.subr.bf16.mxu0 0
        %1661 = vmatpush1.bf16.msra.mxu0 0
        %1662 = vmatprep.subr.bf16.mxu0 0
        %1663 = vmatpush1.bf16.msra.mxu0 0
        %1664 = vmatprep.subr.bf16.mxu0 0
        %1665 = vmatpush1.bf16.msra.mxu0 0
        %1666 = vmatprep.subr.bf16.mxu0 0
        %1667 = vmatpush1.bf16.msra.mxu0 0
        %1668 = vmatprep.subr.bf16.mxu0 0
        %1669 = vmatpush1.bf16.msra.mxu0 0
        %1670 = vmatprep.subr.bf16.mxu0 0
        %1671 = vmatpush1.bf16.msra.mxu0 0
        %1672 = vmatprep.mubr.bf16.mxu0 0
        %1673 = vmatmul.mubr.bf16.gmra.mrb[0].mxu0 %v1638
        %v1674 = vpop.f32.mrb[0].mxu0
        %v1675 = vadd.f32 %v1624, %v1674
        %v1676 = vpop.f32.mrb[0].mxu0
        %v1677 = vpop.f32.mrb[0].mxu0
        %v1678 = vadd.f32 %v1624, %v1677
        %v1679 = vpop.f32.mrb[0].mxu0
        %1680 = vdwg.mxu0
        %v1681 = vadd.f32 %v611, %v1675
        %v1682 = vadd.f32 %v612, %v1678
        %v1683 = vsel %vm635, %v1681, 0.0
        %1684 = vadd.xlane.f32.xlu0 %v1683
        %v1685 = vpop.xlane.xlu0 %1684
        %v1686 = vsel %vm635, %v1682, 0.0
        %1687 = vadd.xlane.f32.xlu0 %v1686
        %v1688 = vpop.xlane.xlu0 %1687
        %v1689 = vrcp.pop 32.0
        %v1690 = vmul.f32 %v1685, %v1689
        %v1691 = vmul.f32 %v1688, %v1689
        %v1692 = vsub.f32 %v1681, %v1690
        %v1693 = vsub.f32 %v1682, %v1691
        %v1694 = vmul.f32 %v1692, %v1692
        %v1695 = vmul.f32 %v1693, %v1693
        %v1696 = vsel %vm635, %v1694, 0.0
        %1697 = vadd.xlane.f32.xlu0 %v1696
        %v1698 = vpop.xlane.xlu0 %1697
        %v1699 = vsel %vm635, %v1695, 0.0
        %1700 = vadd.xlane.f32.xlu0 %v1699
        %v1701 = vpop.xlane.xlu0 %1700
        %v1702 = vmul.f32 %v1698, %v1689
        %v1703 = vmul.f32 %v1701, %v1689
        %v1704 = vadd.f32 %v1702, 1e-05
        %v1705 = vadd.f32 %v1703, 1e-05
        %v1706 = vrsqrt.pop %v1704
        %v1707 = vrsqrt.pop %v1705
        %v1708 = vmul.f32 %v1692, %v1706
        %v1709 = vmul.f32 %v1693, %v1707
        %v1710 = vlaneseq
        %v1711 = vshrl.u32 %v1710, 7
        %v1712 = vsub.s32 4, %v1711
        %v1713 = vrot.slane %v613, %v1712
        %v1714 = vmul.f32 %v1708, %v1713
        %v1715 = vmul.f32 %v1709, %v1713
        %v1716 = vlaneseq
        %v1717 = vshrl.u32 %v1716, 7
        %v1718 = vsub.s32 5, %v1717
        %v1719 = vrot.slane %v613, %v1718
        %v1720 = vadd.f32 %v1714, %v1719
        %v1721 = vadd.f32 %v1715, %v1719
        %v1722 = vpack.c.bf16 %v1721, %v1720
        %v1723 = vld [vmem:[%s528] sm:$0xf]
        %v1724 = vld [vmem:[%s528 + $0x4] sm:$0xf]
        %v1725 = vld [vmem:[%s528 + $0x8] sm:$0xf]
        %v1726 = vld [vmem:[%s528 + $0xc] sm:$0xf]
        %v1727 = vlaneseq
        %v1728 = vshrl.u32 %v1727, 7
        %v1729 = vsub.s32 2, %v1728
        %v1730 = vrot.slane %v613, %v1729
        %v1735 = vunpack.c.l.b16 %v1723
        %v1736 = vunpack.c.l.b16 %v1724
        %v1737 = vunpack.c.l.b16 %v1725
        %v1738 = vunpack.c.l.b16 %v1726
        %v1739 = vpack.c.b16 %v1736, %v1735
        %v1740 = vpack.c.b16 %v1738, %v1737
        %v1744 = vsel %vm635, %v1722, 0
        %1746 = vmatprep.subr.bf16.mxu0 0
        %1747 = vmatpush1.bf16.msra.mxu0 %v1739
        %1748 = vmatprep.subr.bf16.mxu0 0
        %1749 = vmatpush1.bf16.msra.mxu0 %v1740
        %1750 = vmatprep.subr.bf16.mxu0 0
        %1751 = vmatpush1.bf16.msra.mxu0 0
        %1752 = vmatprep.subr.bf16.mxu0 0
        %1753 = vmatpush1.bf16.msra.mxu0 0
        %1754 = vmatprep.subr.bf16.mxu0 0
        %1755 = vmatpush1.bf16.msra.mxu0 0
        %1756 = vmatprep.subr.bf16.mxu0 0
        %1757 = vmatpush1.bf16.msra.mxu0 0
        %1758 = vmatprep.subr.bf16.mxu0 0
        %1759 = vmatpush1.bf16.msra.mxu0 0
        %1760 = vmatprep.subr.bf16.mxu0 0
        %1761 = vmatpush1.bf16.msra.mxu0 0
        %1762 = vmatprep.subr.bf16.mxu0 0
        %1763 = vmatpush1.bf16.msra.mxu0 0
        %1764 = vmatprep.subr.bf16.mxu0 0
        %1765 = vmatpush1.bf16.msra.mxu0 0
        %1766 = vmatprep.subr.bf16.mxu0 0
        %1767 = vmatpush1.bf16.msra.mxu0 0
        %1768 = vmatprep.subr.bf16.mxu0 0
        %1769 = vmatpush1.bf16.msra.mxu0 0
        %1770 = vmatprep.subr.bf16.mxu0 0
        %1771 = vmatpush1.bf16.msra.mxu0 0
        %1772 = vmatprep.subr.bf16.mxu0 0
        %1773 = vmatpush1.bf16.msra.mxu0 0
        %1774 = vmatprep.subr.bf16.mxu0 0
        %1775 = vmatpush1.bf16.msra.mxu0 0
        %1776 = vmatprep.subr.bf16.mxu0 0
        %1777 = vmatpush1.bf16.msra.mxu0 0
        %1778 = vmatprep.mubr.bf16.mxu0 0
        %1779 = vmatmul.mubr.bf16.gmra.mrb[0].mxu0 %v1744
        %v1780 = vpop.f32.mrb[0].mxu0
        %v1781 = vadd.f32 %v1730, %v1780
        %v1782 = vpop.f32.mrb[0].mxu0
        %v1783 = vpop.f32.mrb[0].mxu0
        %v1784 = vadd.f32 %v1730, %v1783
        %v1785 = vpop.f32.mrb[0].mxu0
        %1786 = vdwg.mxu0
        %v1787 = vmax.f32 %v1781, 0.0
        %v1788 = vmax.f32 %v1784, 0.0
        %v1789 = vpack.c.bf16 %v1788, %v1787
        %v1790 = vld [vmem:[%s533] sm:$0xf]
        %v1791 = vld [vmem:[%s533 + $0x4] sm:$0xf]
        %v1792 = vld [vmem:[%s533 + $0x8] sm:$0xf]
        %v1793 = vld [vmem:[%s533 + $0xc] sm:$0xf]
        %v1794 = vld [vmem:[%s533 + $0x10] sm:$0xf]
        %v1795 = vld [vmem:[%s533 + $0x14] sm:$0xf]
        %v1796 = vld [vmem:[%s533 + $0x18] sm:$0xf]
        %v1797 = vld [vmem:[%s533 + $0x1c] sm:$0xf]
        %v1798 = vlaneseq
        %v1799 = vshrl.u32 %v1798, 7
        %v1800 = vsub.s32 3, %v1799
        %v1801 = vrot.slane %v613, %v1800
        %v1810 = vunpack.c.l.b16 %v1790
        %v1811 = vunpack.c.l.b16 %v1791
        %v1812 = vunpack.c.l.b16 %v1792
        %v1813 = vunpack.c.l.b16 %v1793
        %v1814 = vunpack.c.l.b16 %v1794
        %v1815 = vunpack.c.l.b16 %v1795
        %v1816 = vunpack.c.l.b16 %v1796
        %v1817 = vunpack.c.l.b16 %v1797
        %v1818 = vpack.c.b16 %v1811, %v1810
        %v1819 = vpack.c.b16 %v1813, %v1812
        %v1820 = vpack.c.b16 %v1815, %v1814
        %v1821 = vpack.c.b16 %v1817, %v1816
        %vm1826 = vcmask 523264
        %v1828 = vsel %vm1826, %v1789, 0
        %1830 = vmatprep.subr.bf16.mxu0 0
        %1831 = vmatpush1.bf16.msra.mxu0 %v1818
        %1832 = vmatprep.subr.bf16.mxu0 0
        %1833 = vmatpush1.bf16.msra.mxu0 %v1819
        %1834 = vmatprep.subr.bf16.mxu0 0
        %1835 = vmatpush1.bf16.msra.mxu0 %v1820
        %1836 = vmatprep.subr.bf16.mxu0 0
        %1837 = vmatpush1.bf16.msra.mxu0 %v1821
        %1838 = vmatprep.subr.bf16.mxu0 0
        %1839 = vmatpush1.bf16.msra.mxu0 0
        %1840 = vmatprep.subr.bf16.mxu0 0
        %1841 = vmatpush1.bf16.msra.mxu0 0
        %1842 = vmatprep.subr.bf16.mxu0 0
        %1843 = vmatpush1.bf16.msra.mxu0 0
        %1844 = vmatprep.subr.bf16.mxu0 0
        %1845 = vmatpush1.bf16.msra.mxu0 0
        %1846 = vmatprep.subr.bf16.mxu0 0
        %1847 = vmatpush1.bf16.msra.mxu0 0
        %1848 = vmatprep.subr.bf16.mxu0 0
        %1849 = vmatpush1.bf16.msra.mxu0 0
        %1850 = vmatprep.subr.bf16.mxu0 0
        %1851 = vmatpush1.bf16.msra.mxu0 0
        %1852 = vmatprep.subr.bf16.mxu0 0
        %1853 = vmatpush1.bf16.msra.mxu0 0
        %1854 = vmatprep.subr.bf16.mxu0 0
        %1855 = vmatpush1.bf16.msra.mxu0 0
        %1856 = vmatprep.subr.bf16.mxu0 0
        %1857 = vmatpush1.bf16.msra.mxu0 0
        %1858 = vmatprep.subr.bf16.mxu0 0
        %1859 = vmatpush1.bf16.msra.mxu0 0
        %1860 = vmatprep.subr.bf16.mxu0 0
        %1861 = vmatpush1.bf16.msra.mxu0 0
        %1862 = vmatprep.mubr.bf16.mxu0 0
        %1863 = vmatmul.mubr.bf16.gmra.mrb[0].mxu0 %v1828
        %v1864 = vpop.f32.mrb[0].mxu0
        %v1865 = vadd.f32 %v1801, %v1864
        %v1866 = vpop.f32.mrb[0].mxu0
        %v1867 = vpop.f32.mrb[0].mxu0
        %v1868 = vadd.f32 %v1801, %v1867
        %v1869 = vpop.f32.mrb[0].mxu0
        %1870 = vdwg.mxu0
        %v1871 = vadd.f32 %v1720, %v1865
        %v1872 = vadd.f32 %v1721, %v1868
        %v1873 = vsel %vm635, %v1871, 0.0
        %1874 = vadd.xlane.f32.xlu0 %v1873
        %v1875 = vpop.xlane.xlu0 %1874
        %v1876 = vsel %vm635, %v1872, 0.0
        %1877 = vadd.xlane.f32.xlu0 %v1876
        %v1878 = vpop.xlane.xlu0 %1877
        %v1879 = vmul.f32 %v1875, %v1689
        %v1880 = vmul.f32 %v1878, %v1689
        %v1881 = vsub.f32 %v1871, %v1879
        %v1882 = vsub.f32 %v1872, %v1880
        %v1883 = vmul.f32 %v1881, %v1881
        %v1884 = vmul.f32 %v1882, %v1882
        %v1885 = vsel %vm635, %v1883, 0.0
        %1886 = vadd.xlane.f32.xlu0 %v1885
        %v1887 = vpop.xlane.xlu0 %1886
        %v1888 = vsel %vm635, %v1884, 0.0
        %1889 = vadd.xlane.f32.xlu0 %v1888
        %v1890 = vpop.xlane.xlu0 %1889
        %v1891 = vmul.f32 %v1887, %v1689
        %v1892 = vmul.f32 %v1890, %v1689
        %v1893 = vadd.f32 %v1891, 1e-05
        %v1894 = vadd.f32 %v1892, 1e-05
        %v1895 = vrsqrt.pop %v1893
        %v1896 = vrsqrt.pop %v1894
        %v1897 = vmul.f32 %v1881, %v1895
        %v1898 = vmul.f32 %v1882, %v1896
        %v1899 = vlaneseq
        %v1900 = vshrl.u32 %v1899, 7
        %v1901 = vsub.s32 6, %v1900
        %v1902 = vrot.slane %v613, %v1901
        %v1903 = vmul.f32 %v1897, %v1902
        %v1904 = vmul.f32 %v1898, %v1902
        %v1905 = vlaneseq
        %v1906 = vshrl.u32 %v1905, 7
        %v1907 = vsub.s32 7, %v1906
        %v1908 = vrot.slane %v613, %v1907
        %v1909 = vadd.f32 %v1903, %v1908
        %v1910 = vadd.f32 %v1904, %v1908
        %1911 = vst.msk [vmem:[#allocation2] sm:$0xff] %vm635, %v1909
        %1912 = vst.msk [vmem:[#allocation2 + $0x8] sm:$0xff] %vm635, %v1910
        %p1913 = scmp.eq.s32.totalorder %s29, 1
        // Predicated region
        $region73: #{tst_forward.1} parent=67 // pred_check
          %p1914 = pneg %p1913
        $region74: #{tst_forward.1} parent=67 // pred_check_branch
          %1916 = sbr.rel (%p1914) target = $region76
        $region75: #{tst_forward.1} parent=67 // pred_region
          %v1917 = vld [vmem:[%s10] sm:$0xf]
          %v1918 = vld [vmem:[%s10 + $0x4] sm:$0xf]
          %v1919 = vld [vmem:[%s10 + $0x8] sm:$0xf]
          %v1920 = vld [vmem:[%s10 + $0xc] sm:$0xf]
          %v1921 = vld [vmem:[%s11] sm:$0x1]
          %v1922 = vpack.c.bf16 %v1909, %v1909
          %v1924 = vlaneseq
          %v1925 = vshrl.u32 %v1924, 7
          %v1926 = vsub.s32 0, %v1925
          %v1927 = vrot.slane %v1921, %v1926
          %v1930 = vrot.slane %v1922, 2
          %v1935 = vunpack.c.l.b16 %v1917
          %v1936 = vunpack.c.l.b16 %v1918
          %v1937 = vunpack.c.l.b16 %v1919
          %v1938 = vunpack.c.l.b16 %v1920
          %v1939 = vpack.c.b16 %v1936, %v1935
          %v1940 = vpack.c.b16 %v1938, %v1937
          %v1944 = vsel %vm635, %v1930, 0
          %1946 = vmatprep.subr.bf16.mxu0 0
          %1947 = vmatpush1.bf16.msra.mxu0 %v1939
          %1948 = vmatprep.subr.bf16.mxu0 0
          %1949 = vmatpush1.bf16.msra.mxu0 %v1940
          %1950 = vmatprep.subr.bf16.mxu0 0
          %1951 = vmatpush1.bf16.msra.mxu0 0
          %1952 = vmatprep.subr.bf16.mxu0 0
          %1953 = vmatpush1.bf16.msra.mxu0 0
          %1954 = vmatprep.subr.bf16.mxu0 0
          %1955 = vmatpush1.bf16.msra.mxu0 0
          %1956 = vmatprep.subr.bf16.mxu0 0
          %1957 = vmatpush1.bf16.msra.mxu0 0
          %1958 = vmatprep.subr.bf16.mxu0 0
          %1959 = vmatpush1.bf16.msra.mxu0 0
          %1960 = vmatprep.subr.bf16.mxu0 0
          %1961 = vmatpush1.bf16.msra.mxu0 0
          %1962 = vmatprep.subr.bf16.mxu0 0
          %1963 = vmatpush1.bf16.msra.mxu0 0
          %1964 = vmatprep.subr.bf16.mxu0 0
          %1965 = vmatpush1.bf16.msra.mxu0 0
          %1966 = vmatprep.subr.bf16.mxu0 0
          %1967 = vmatpush1.bf16.msra.mxu0 0
          %1968 = vmatprep.subr.bf16.mxu0 0
          %1969 = vmatpush1.bf16.msra.mxu0 0
          %1970 = vmatprep.subr.bf16.mxu0 0
          %1971 = vmatpush1.bf16.msra.mxu0 0
          %1972 = vmatprep.subr.bf16.mxu0 0
          %1973 = vmatpush1.bf16.msra.mxu0 0
          %1974 = vmatprep.subr.bf16.mxu0 0
          %1975 = vmatpush1.bf16.msra.mxu0 0
          %1976 = vmatprep.subr.bf16.mxu0 0
          %1977 = vmatpush1.bf16.msra.mxu0 0
          %1978 = vmatprep.mubr.bf16.mxu0 0
          %1979 = vmatmul.mubr.bf16.gmra.mrb[0].mxu0 %v1944
          %v1980 = vpop.f32.mrb[0].mxu0
          %v1981 = vadd.f32 %v1927, %v1980
          %v1982 = vpop.f32.mrb[0].mxu0
          %v1983 = vpop.f32.mrb[0].mxu0
          %v1984 = vpop.f32.mrb[0].mxu0
          %1985 = vdwg.mxu0
          %vm1986 = vcmask 27648
          %1987 = vst.msk [vmem:[#allocation4] sm:$0xf] %vm1986, %v1981
          %v1988 = vpack.c.bf16 %v1910, %v1910
          %v1990 = vrot.slane %v1988, 2
          %v1992 = vsel %vm635, %v1990, 0
          %1994 = vmatprep.subr.bf16.mxu0 0
          %1995 = vmatpush1.bf16.msra.mxu0 %v1939
          %1996 = vmatprep.subr.bf16.mxu0 0
          %1997 = vmatpush1.bf16.msra.mxu0 %v1940
          %1998 = vmatprep.subr.bf16.mxu0 0
          %1999 = vmatpush1.bf16.msra.mxu0 0
          %2000 = vmatprep.subr.bf16.mxu0 0
          %2001 = vmatpush1.bf16.msra.mxu0 0
          %2002 = vmatprep.subr.bf16.mxu0 0
          %2003 = vmatpush1.bf16.msra.mxu0 0
          %2004 = vmatprep.subr.bf16.mxu0 0
          %2005 = vmatpush1.bf16.msra.mxu0 0
          %2006 = vmatprep.subr.bf16.mxu0 0
          %2007 = vmatpush1.bf16.msra.mxu0 0
          %2008 = vmatprep.subr.bf16.mxu0 0
          %2009 = vmatpush1.bf16.msra.mxu0 0
          %2010 = vmatprep.subr.bf16.mxu0 0
          %2011 = vmatpush1.bf16.msra.mxu0 0
          %2012 = vmatprep.subr.bf16.mxu0 0
          %2013 = vmatpush1.bf16.msra.mxu0 0
          %2014 = vmatprep.subr.bf16.mxu0 0
          %2015 = vmatpush1.bf16.msra.mxu0 0
          %2016 = vmatprep.subr.bf16.mxu0 0
          %2017 = vmatpush1.bf16.msra.mxu0 0
          %2018 = vmatprep.subr.bf16.mxu0 0
          %2019 = vmatpush1.bf16.msra.mxu0 0
          %2020 = vmatprep.subr.bf16.mxu0 0
          %2021 = vmatpush1.bf16.msra.mxu0 0
          %2022 = vmatprep.subr.bf16.mxu0 0
          %2023 = vmatpush1.bf16.msra.mxu0 0
          %2024 = vmatprep.subr.bf16.mxu0 0
          %2025 = vmatpush1.bf16.msra.mxu0 0
          %2026 = vmatprep.mubr.bf16.mxu0 0
          %2027 = vmatmul.mubr.bf16.gmra.mrb[0].mxu0 %v1992
          %v2028 = vpop.f32.mrb[0].mxu0
          %v2029 = vadd.f32 %v1927, %v2028
          %v2030 = vpop.f32.mrb[0].mxu0
          %v2031 = vpop.f32.mrb[0].mxu0
          %v2032 = vpop.f32.mrb[0].mxu0
          %2033 = vdwg.mxu0
          %s2034 = scalar_lea.vmem [#allocation4], 4
          %2035 = vst.msk [vmem:[%s2034] sm:$0xf] %vm1986, %v2029
        $region76: #{tst_forward.1} parent=67 // pred_fallthru
          _
        // Predicated region
        $region77: #{tst_forward.1} parent=67 // pred_check
          %p2036 = pneg %p341
        $region78: #{tst_forward.1} parent=67 // pred_check_branch
          %2038 = sbr.rel (%p2036) target = $region80
        $region79: #{tst_forward.1} parent=67 // pred_region
          %s2039 = smul.u32 2, %s28
          %s2041 = ssub.s32 128, 128
          %2042 = vsyncadd [#allocation5], %s2041
          %s2043 = smul.addr %s2039, 64
          %s2044 = scalar_lea.hbm %s12, %s2043
          %s2045 = sshll.u32 [#allocation4], 4
          %s2046 = int_to_ptr.vmem [resolvable:$true] %s2045
          %2051 = dma.vmem_to_hbm [thread:$0]  %s2046, 128, %s2044, [#allocation5], 64, 64, 4
        $region80: #{tst_forward.1} parent=67 // pred_fallthru
          _
        // Predicated region
        $region81: #{tst_forward.1} parent=67 // pred_check
          %p2052 = pneg %p341
        $region82: #{tst_forward.1} parent=67 // pred_check_branch
          %2054 = sbr.rel (%p2052) target = $region84
        $region83: #{tst_forward.1} parent=67 // pred_region
          %2055 = dma.done [#allocation5], 128
        $region84: #{tst_forward.1} parent=67 // pred_fallthru
          _
      $region68: #{tst_forward.1} parent=5 // pred_fallthru
        _
      %p2056 = scmp.le.s32.totalorder 2, %s19
      // Predicated region
      $region85: #{tst_forward.1} parent=5 // pred_check
        %p2057 = pneg %p2056
      $region86: #{tst_forward.1} parent=5 // pred_check_branch
        %2059 = sbr.rel (%p2057) target = $region88
      $region87: #{tst_forward.1} parent=5 // pred_region
        %s2060 = ssub.s32 %s19, 2
      $region88: #{tst_forward.1} parent=5 // pred_fallthru
        _
    $region6: #{tst_forward.1} parent=1 // loop_footer
      %s23 = sadd.s32 1, %s19
    $region7: #{tst_forward.1} parent=1 // loop_footer_branch
      %18 = sbr.rel target = $region3
    $region8: #{tst_forward.1} parent=1 // loop_exit
      _
    %2061 = vsyncpa [#allocation5], 1
    %s2062 = scalar_lea.sflag [#allocation5], 1
    %2063 = vsyncpa %s2062, 1

</llo_original>
